<compile_context>
chip_gen: v6e
topology: v6e:2x2x1
jax: 0.10.0
libtpu: 0.0.40
codegen_flags: <defaults>
</compile_context>

<pallas_src>
import math

import jax
import jax.numpy as jnp
from jax import lax
from jax.experimental import pallas as pl
from jax.experimental.pallas import tpu as pltpu


def _silu(x):
    return x * (1.0 / (1.0 + jnp.exp(-x)))


def _softplus(x):
    return jnp.where(x > 20.0, x, jnp.log1p(jnp.exp(jnp.minimum(x, 20.0))))


def mamba_residual_kernel(
    x_ref,        # (1, L, D)       input block (one batch element)
    rmsw_ref,     # (1, D)          RMSNorm weight
    w_in_ref,     # (D, 2*d_inner)  in_proj.weight.T
    w_conv_ref,   # (K, d_inner)    conv1d depthwise weight (tap-major)
    b_conv_ref,   # (1, d_inner)    conv1d bias
    w_xproj_ref,  # (d_inner, dt_rank + 2*d_state)  x_proj.weight.T
    w_dt_ref,     # (dt_rank, d_inner)              dt_proj.weight.T
    b_dt_ref,     # (1, d_inner)                    dt_proj.bias
    a_neg_t_ref,  # (d_state, d_inner)   A = -exp(A_log), transposed (hoisted)
    d_ref,        # (1, d_inner)
    w_out_ref,    # (d_inner, D)    out_proj.weight.T
    out_ref,      # (1, L, D)
):
    L = x_ref.shape[1]
    d_inner = w_dt_ref.shape[1]
    d_state = a_neg_t_ref.shape[0]
    K = w_conv_ref.shape[0]
    dt_rank = w_dt_ref.shape[0]

    x_in = x_ref[0]                                             # (L, D)

    # ---- RMSNorm (eps = 1e-5) ----
    ms = jnp.mean(x_in * x_in, axis=-1, keepdims=True)
    xn = x_in * lax.rsqrt(ms + 1e-5) * rmsw_ref[...]            # (L, D)

    # ---- in_proj (no bias), split into x / z branches ----
    xz = jnp.dot(xn, w_in_ref[...], preferred_element_type=jnp.float32)
    xpart = xz[:, :d_inner]                                     # (L, d_inner)
    zpart = xz[:, d_inner:]                                     # (L, d_inner)

    # ---- causal depthwise conv1d (padding = K-1, truncated to L) ----
    # Built from register values (no scratch buffer, no per-step re-zeroing).
    xpad = jnp.concatenate(
        [jnp.zeros((K - 1, d_inner), jnp.float32), xpart], axis=0)
    acc = jnp.zeros((L, d_inner), jnp.float32)
    for k in range(K):                                          # K tiny / static
        acc = acc + xpad[k:k + L, :] * w_conv_ref[k:k + 1, :]
    xconv = _silu(acc + b_conv_ref[...])                        # (L, d_inner)

    # ---- x_proj -> (delta_lowrank, B, C) ----
    dbc = jnp.dot(xconv, w_xproj_ref[...], preferred_element_type=jnp.float32)
    dt_lr = dbc[:, :dt_rank]                                    # (L, dt_rank)
    Bm = dbc[:, dt_rank:dt_rank + d_state]                      # (L, d_state)
    Cm = dbc[:, dt_rank + d_state:dt_rank + 2 * d_state]        # (L, d_state)

    # ---- dt_proj on the VPU (contraction dim dt_rank is tiny: skip the MXU) ----
    dt_pre = jnp.zeros((L, d_inner), jnp.float32)
    for r in range(dt_rank):                                    # dt_rank static
        dt_pre = dt_pre + dt_lr[:, r:r + 1] * w_dt_ref[r:r + 1, :]
    delta = _softplus(dt_pre + b_dt_ref[...])                   # (L, d_inner)

    # ---- selective scan, state laid out (d_state, d_inner): d_inner on lanes ----
    a_neg_t = a_neg_t_ref[...]                                  # (d_state, d_inner)
    du = delta * xconv                                          # (L, d_inner)
    BmT = Bm[:, :, None]                                        # (L, d_state, 1)
    CmT = Cm[:, :, None]                                        # (L, d_state, 1)

    h = jnp.zeros((d_state, d_inner), jnp.float32)
    y_rows = []
    # Fully unrolled scan (L is small); C-contraction folded in each step.
    for t in range(L):
        dA_t = jnp.exp(delta[t:t + 1, :] * a_neg_t)             # (d_state, d_inner)
        dBx_t = du[t:t + 1, :] * BmT[t]                         # (d_state, d_inner)
        h = dA_t * h + dBx_t
        y_rows.append(jnp.sum(h * CmT[t], axis=0, keepdims=True))   # (1, d_inner)
    y = jnp.concatenate(y_rows, axis=0)                         # (L, d_inner)

    y = y + xconv * d_ref[...]                                  # D skip
    y = y * _silu(zpart)                                        # gate

    out = jnp.dot(y, w_out_ref[...], preferred_element_type=jnp.float32)  # (L, D)

    # block_mode == 'residual' / 'none': out = mamba(norm(x)) + x
    # TODO(synk): 'refined'/'interpolated' modes (external residual) and the
    # recurrent .step() path are not wired up in this kernel.
    out_ref[0] = out + x_in


def mamba_residual_block(x, p):
    B, L, D = x.shape
    d_inner = p["W_dt"].shape[1]
    d_state = p["A_log"].shape[1]
    K = p["W_conv"].shape[0]
    dt_rank = p["W_dt"].shape[0]

    # Hoist A = -exp(A_log) out of the kernel (constant across batch/grid);
    # transpose so d_inner is on the lane axis inside the kernel.
    a_neg_t = -jnp.exp(p["A_log"]).T                            # (d_state, d_inner)

    def full(shape):
        n = len(shape)
        return pl.BlockSpec(shape, lambda b: (0,) * n)

    in_specs = [
        pl.BlockSpec((1, L, D), lambda b: (b, 0, 0)),       # x
        full((1, D)),                                       # rms_w
        full((D, 2 * d_inner)),                             # W_in
        full((K, d_inner)),                                 # W_conv
        full((1, d_inner)),                                 # b_conv
        full((d_inner, dt_rank + 2 * d_state)),             # W_xproj
        full((dt_rank, d_inner)),                           # W_dt
        full((1, d_inner)),                                 # b_dt
        full((d_state, d_inner)),                           # A (neg, transposed)
        full((1, d_inner)),                                 # D
        full((d_inner, D)),                                 # W_out
    ]
    out_spec = pl.BlockSpec((1, L, D), lambda b: (b, 0, 0))

    # Advisory cost estimate so XLA schedules neighbouring ops sensibly.
    flops = (2 * B * L * (D * 2 * d_inner
                          + d_inner * (dt_rank + 2 * d_state)
                          + dt_rank * d_inner
                          + d_inner * D)
             + 6 * B * L * d_inner * d_state)
    transcendentals = B * L * (d_inner * d_state + 4 * d_inner + 1)
    bytes_accessed = 4 * (2 * B * L * D
                          + D * 2 * d_inner
                          + d_inner * (dt_rank + 2 * d_state)
                          + dt_rank * d_inner + d_inner * D
                          + d_state * d_inner + (K + 4) * d_inner + 2 * D)

    return pl.pallas_call(
        mamba_residual_kernel,
        out_shape=jax.ShapeDtypeStruct((B, L, D), jnp.float32),
        grid_spec=pltpu.PrefetchScalarGridSpec(
            num_scalar_prefetch=0,
            grid=(B,),
            in_specs=in_specs,
            out_specs=out_spec,
        ),
        compiler_params=pltpu.CompilerParams(
            dimension_semantics=("parallel",)),   # batch elems independent (2 TC on v7x)
        cost_estimate=pl.CostEstimate(
            flops=flops,
            transcendentals=transcendentals,
            bytes_accessed=bytes_accessed),
    )(x, p["rms_w"], p["W_in"], p["W_conv"], p["b_conv"], p["W_xproj"],
      p["W_dt"], p["b_dt"], a_neg_t, p["D"], p["W_out"])


def init_params(key, d_model, d_state, expand, d_conv):
    d_inner = expand * d_model
    dt_rank = math.ceil(d_model / 16)
    ks = jax.random.split(key, 7)

    def nrm(k, shape, scale):
        return jax.random.normal(k, shape, jnp.float32) * scale

    return {
        "rms_w": jnp.ones((1, d_model), jnp.float32),
        "W_in": nrm(ks[0], (d_model, 2 * d_inner), 1.0 / math.sqrt(d_model)),
        "W_conv": nrm(ks[1], (d_conv, d_inner), 1.0 / math.sqrt(d_conv)),
        "b_conv": nrm(ks[2], (1, d_inner), 0.1),
        "W_xproj": nrm(ks[3], (d_inner, dt_rank + 2 * d_state),
                       1.0 / math.sqrt(d_inner)),
        "W_dt": nrm(ks[4], (dt_rank, d_inner), 1.0 / math.sqrt(dt_rank)),
        "b_dt": nrm(ks[5], (1, d_inner), 0.1),
        "A_log": jnp.log(jnp.tile(
            jnp.arange(1, d_state + 1, dtype=jnp.float32)[None, :],
            (d_inner, 1))),
        "D": jnp.ones((1, d_inner), jnp.float32),
        "W_out": nrm(ks[6], (d_inner, d_model), 1.0 / math.sqrt(d_inner)),
    }


def reference(x, p):
    """Pure-JAX reference of the same forward (for a sanity check)."""
    d_inner = p["W_dt"].shape[1]
    d_state = p["A_log"].shape[1]
    dt_rank = p["W_dt"].shape[0]
    K = p["W_conv"].shape[0]
    L = x.shape[1]

    ms = jnp.mean(x * x, axis=-1, keepdims=True)
    xn = x * lax.rsqrt(ms + 1e-5) * p["rms_w"]
    xz = xn @ p["W_in"]
    xp, z = xz[..., :d_inner], xz[..., d_inner:]

    xpad = jnp.pad(xp, ((0, 0), (K - 1, 0), (0, 0)))
    xc = sum(xpad[:, k:k + L, :] * p["W_conv"][k] for k in range(K)) + p["b_conv"]
    xc = xc * (1.0 / (1.0 + jnp.exp(-xc)))

    dbc = xc @ p["W_xproj"]
    dt_lr = dbc[..., :dt_rank]
    Bm = dbc[..., dt_rank:dt_rank + d_state]
    Cm = dbc[..., dt_rank + d_state:]
    delta = jax.nn.softplus(dt_lr @ p["W_dt"] + p["b_dt"])
    A = -jnp.exp(p["A_log"])
    dA = jnp.exp(delta[..., None] * A)
    dBx = delta[..., None] * Bm[:, :, None, :] * xc[..., None]

    def one(dA_b, dBx_b):
        def step(h, inp):
            a, bx = inp
            h = a * h + bx
            return h, h
        _, hs = lax.scan(step, jnp.zeros((d_inner, d_state), jnp.float32),
                         (dA_b, dBx_b))
        return hs

    hs = jax.vmap(one)(dA, dBx)
    y = jnp.sum(hs * Cm[:, :, None, :], axis=-1) + xc * p["D"]
    y = y * (z * (1.0 / (1.0 + jnp.exp(-z))))
    return y @ p["W_out"] + x


if __name__ == "__main__":
    key = jax.random.PRNGKey(0)
    kx, kp = jax.random.split(key)

    # config: d_model=32, d_state=16, expand=2, d_conv=4, block_mode='residual'
    B, L, d_model = 2, 8, 32
    d_state, expand, d_conv = 16, 2, 4

    x = jax.random.normal(kx, (B, L, d_model), jnp.float32)
    params = init_params(kp, d_model, d_state, expand, d_conv)

    out = mamba_residual_block(x, params)
    out = jax.block_until_ready(out)

    ref = reference(x, params)
    assert out.shape == (B, L, d_model)
    if not jnp.allclose(out, ref, rtol=2e-2, atol=2e-2):
        raise AssertionError("Pallas kernel mismatch vs JAX reference")

    print("KERNEL_OK")
</pallas_src>

<mosaic_0001>
module attributes {stable_mosaic.version = 11 : i64} {
  func.func @mamba_residual_kernel(%arg0: i32, %arg1: memref<1x8x32xf32, #tpu.memory_space<vmem>>, %arg2: memref<1x32xf32, #tpu.memory_space<vmem>>, %arg3: memref<32x128xf32, #tpu.memory_space<vmem>>, %arg4: memref<4x64xf32, #tpu.memory_space<vmem>>, %arg5: memref<1x64xf32, #tpu.memory_space<vmem>>, %arg6: memref<64x34xf32, #tpu.memory_space<vmem>>, %arg7: memref<2x64xf32, #tpu.memory_space<vmem>>, %arg8: memref<1x64xf32, #tpu.memory_space<vmem>>, %arg9: memref<16x64xf32, #tpu.memory_space<vmem>>, %arg10: memref<1x64xf32, #tpu.memory_space<vmem>>, %arg11: memref<64x32xf32, #tpu.memory_space<vmem>>, %arg12: memref<1x8x32xf32, #tpu.memory_space<vmem>>) attributes {dimension_semantics = [#tpu.dimension_semantics<parallel>], iteration_bounds = array<i64: 2>, scalar_prefetch = 0 : i64, scratch_operands = 0 : i64, tpu.core_type = #tpu.core_type<tc>, window_params = [{transform_indices = @transform_0, window_bounds = array<i64: 1, 8, 32>}, {pipeline_mode = #tpu.pipeline_mode<synchronous>, transform_indices = @transform_1, window_bounds = array<i64: 1, 32>}, {pipeline_mode = #tpu.pipeline_mode<synchronous>, transform_indices = @transform_2, window_bounds = array<i64: 32, 128>}, {pipeline_mode = #tpu.pipeline_mode<synchronous>, transform_indices = @transform_3, window_bounds = array<i64: 4, 64>}, {pipeline_mode = #tpu.pipeline_mode<synchronous>, transform_indices = @transform_4, window_bounds = array<i64: 1, 64>}, {pipeline_mode = #tpu.pipeline_mode<synchronous>, transform_indices = @transform_5, window_bounds = array<i64: 64, 34>}, {pipeline_mode = #tpu.pipeline_mode<synchronous>, transform_indices = @transform_6, window_bounds = array<i64: 2, 64>}, {pipeline_mode = #tpu.pipeline_mode<synchronous>, transform_indices = @transform_7, window_bounds = array<i64: 1, 64>}, {pipeline_mode = #tpu.pipeline_mode<synchronous>, transform_indices = @transform_8, window_bounds = array<i64: 16, 64>}, {pipeline_mode = #tpu.pipeline_mode<synchronous>, transform_indices = @transform_9, window_bounds = array<i64: 1, 64>}, {pipeline_mode = #tpu.pipeline_mode<synchronous>, transform_indices = @transform_10, window_bounds = array<i64: 64, 32>}, {transform_indices = @transform_11, window_bounds = array<i64: 1, 8, 32>}]} {
    %c0 = arith.constant 0 : index
    %c0_0 = arith.constant 0 : index
    %c0_1 = arith.constant 0 : index
    %0 = vector.load %arg1[%c0, %c0_0, %c0_1] : memref<1x8x32xf32, #tpu.memory_space<vmem>>, vector<1x8x32xf32>
    %1 = vector.shape_cast %0 : vector<1x8x32xf32> to vector<8x32xf32>
    %2 = arith.mulf %1, %1 : vector<8x32xf32>
    %cst = arith.constant dense<0.000000e+00> : vector<8xf32>
    %3 = vector.multi_reduction <add>, %2, %cst [1] : vector<8x32xf32> to vector<8xf32>
    %4 = vector.shape_cast %3 : vector<8xf32> to vector<8x1xf32>
    %cst_2 = arith.constant 3.200000e+01 : f32
    %5 = vector.broadcast %cst_2 : f32 to vector<8x1xf32>
    %6 = arith.divf %4, %5 : vector<8x1xf32>
    %cst_3 = arith.constant 9.99999974E-6 : f32
    %7 = vector.broadcast %cst_3 : f32 to vector<8x1xf32>
    %8 = arith.addf %6, %7 : vector<8x1xf32>
    %9 = math.rsqrt %8 : vector<8x1xf32>
    %10 = vector.broadcast %9 : vector<8x1xf32> to vector<8x32xf32>
    %11 = arith.mulf %1, %10 : vector<8x32xf32>
    %c0_4 = arith.constant 0 : index
    %c0_5 = arith.constant 0 : index
    %12 = vector.load %arg2[%c0_4, %c0_5] : memref<1x32xf32, #tpu.memory_space<vmem>>, vector<1x32xf32>
    %13 = vector.broadcast %12 : vector<1x32xf32> to vector<8x32xf32>
    %14 = arith.mulf %11, %13 : vector<8x32xf32>
    %c0_6 = arith.constant 0 : index
    %c0_7 = arith.constant 0 : index
    %15 = vector.load %arg3[%c0_6, %c0_7] : memref<32x128xf32, #tpu.memory_space<vmem>>, vector<32x128xf32>
    %cst_8 = arith.constant dense<0.000000e+00> : vector<8x128xf32>
    %16 = tpu.matmul %14, %15, %cst_8 {dimension_numbers = #tpu.dot_dimension_numbers<[1], [0], [0], [1], [0, 0, 1, 1], [], []>} : vector<8x32xf32>, vector<32x128xf32>, vector<8x128xf32> -> vector<8x128xf32>
    %17 = vector.extract_strided_slice %16 {offsets = [0, 0], sizes = [8, 64], strides = [1, 1]} : vector<8x128xf32> to vector<8x64xf32>
    %18 = vector.extract_strided_slice %16 {offsets = [0, 64], sizes = [8, 64], strides = [1, 1]} : vector<8x128xf32> to vector<8x64xf32>
    %cst_9 = arith.constant 0.000000e+00 : f32
    %19 = vector.broadcast %cst_9 : f32 to vector<3x64xf32>
    %20 = tpu.concatenate %19, %17 in 0 : vector<3x64xf32>, vector<8x64xf32> -> vector<11x64xf32>
    %cst_10 = arith.constant 0.000000e+00 : f32
    %21 = vector.broadcast %cst_10 : f32 to vector<8x64xf32>
    %22 = vector.extract_strided_slice %20 {offsets = [0, 0], sizes = [8, 64], strides = [1, 1]} : vector<11x64xf32> to vector<8x64xf32>
    %c0_11 = arith.constant 0 : index
    %c0_12 = arith.constant 0 : index
    %23 = vector.load %arg4[%c0_11, %c0_12] : memref<4x64xf32, #tpu.memory_space<vmem>>, vector<1x64xf32>
    %24 = vector.broadcast %23 : vector<1x64xf32> to vector<8x64xf32>
    %25 = arith.mulf %22, %24 : vector<8x64xf32>
    %26 = arith.addf %21, %25 : vector<8x64xf32>
    %27 = vector.extract_strided_slice %20 {offsets = [1, 0], sizes = [8, 64], strides = [1, 1]} : vector<11x64xf32> to vector<8x64xf32>
    %c1 = arith.constant 1 : index
    %c0_13 = arith.constant 0 : index
    %28 = vector.load %arg4[%c1, %c0_13] : memref<4x64xf32, #tpu.memory_space<vmem>>, vector<1x64xf32>
    %29 = vector.broadcast %28 : vector<1x64xf32> to vector<8x64xf32>
    %30 = arith.mulf %27, %29 : vector<8x64xf32>
    %31 = arith.addf %26, %30 : vector<8x64xf32>
    %32 = vector.extract_strided_slice %20 {offsets = [2, 0], sizes = [8, 64], strides = [1, 1]} : vector<11x64xf32> to vector<8x64xf32>
    %c2 = arith.constant 2 : index
    %c0_14 = arith.constant 0 : index
    %33 = vector.load %arg4[%c2, %c0_14] : memref<4x64xf32, #tpu.memory_space<vmem>>, vector<1x64xf32>
    %34 = vector.broadcast %33 : vector<1x64xf32> to vector<8x64xf32>
    %35 = arith.mulf %32, %34 : vector<8x64xf32>
    %36 = arith.addf %31, %35 : vector<8x64xf32>
    %37 = vector.extract_strided_slice %20 {offsets = [3, 0], sizes = [8, 64], strides = [1, 1]} : vector<11x64xf32> to vector<8x64xf32>
    %c3 = arith.constant 3 : index
    %c0_15 = arith.constant 0 : index
    %38 = vector.load %arg4[%c3, %c0_15] : memref<4x64xf32, #tpu.memory_space<vmem>>, vector<1x64xf32>
    %39 = vector.broadcast %38 : vector<1x64xf32> to vector<8x64xf32>
    %40 = arith.mulf %37, %39 : vector<8x64xf32>
    %41 = arith.addf %36, %40 : vector<8x64xf32>
    %c0_16 = arith.constant 0 : index
    %c0_17 = arith.constant 0 : index
    %42 = vector.load %arg5[%c0_16, %c0_17] : memref<1x64xf32, #tpu.memory_space<vmem>>, vector<1x64xf32>
    %43 = vector.broadcast %42 : vector<1x64xf32> to vector<8x64xf32>
    %44 = arith.addf %41, %43 : vector<8x64xf32>
    %cst_18 = arith.constant 0.000000e+00 : f32
    %45 = vector.broadcast %cst_18 : f32 to vector<8x64xf32>
    %46 = arith.subf %45, %44 : vector<8x64xf32>
    %47 = math.exp %46 : vector<8x64xf32>
    %cst_19 = arith.constant 1.000000e+00 : f32
    %48 = vector.broadcast %cst_19 : f32 to vector<8x64xf32>
    %49 = arith.addf %48, %47 : vector<8x64xf32>
    %cst_20 = arith.constant 1.000000e+00 : f32
    %50 = vector.broadcast %cst_20 : f32 to vector<8x64xf32>
    %51 = arith.divf %50, %49 : vector<8x64xf32>
    %52 = arith.mulf %44, %51 : vector<8x64xf32>
    %c0_21 = arith.constant 0 : index
    %c0_22 = arith.constant 0 : index
    %53 = vector.load %arg6[%c0_21, %c0_22] : memref<64x34xf32, #tpu.memory_space<vmem>>, vector<64x34xf32>
    %cst_23 = arith.constant dense<0.000000e+00> : vector<8x34xf32>
    %54 = tpu.matmul %52, %53, %cst_23 {dimension_numbers = #tpu.dot_dimension_numbers<[1], [0], [0], [1], [0, 0, 1, 1], [], []>} : vector<8x64xf32>, vector<64x34xf32>, vector<8x34xf32> -> vector<8x34xf32>
    %55 = vector.extract_strided_slice %54 {offsets = [0, 0], sizes = [8, 2], strides = [1, 1]} : vector<8x34xf32> to vector<8x2xf32>
    %56 = vector.extract_strided_slice %54 {offsets = [0, 2], sizes = [8, 16], strides = [1, 1]} : vector<8x34xf32> to vector<8x16xf32>
    %57 = vector.extract_strided_slice %54 {offsets = [0, 18], sizes = [8, 16], strides = [1, 1]} : vector<8x34xf32> to vector<8x16xf32>
    %cst_24 = arith.constant 0.000000e+00 : f32
    %58 = vector.broadcast %cst_24 : f32 to vector<8x64xf32>
    %59 = vector.extract_strided_slice %55 {offsets = [0, 0], sizes = [8, 1], strides = [1, 1]} : vector<8x2xf32> to vector<8x1xf32>
    %c0_25 = arith.constant 0 : index
    %c0_26 = arith.constant 0 : index
    %60 = vector.load %arg7[%c0_25, %c0_26] : memref<2x64xf32, #tpu.memory_space<vmem>>, vector<1x64xf32>
    %61 = vector.broadcast %59 : vector<8x1xf32> to vector<8x64xf32>
    %62 = vector.broadcast %60 : vector<1x64xf32> to vector<8x64xf32>
    %63 = arith.mulf %61, %62 : vector<8x64xf32>
    %64 = arith.addf %58, %63 : vector<8x64xf32>
    %65 = vector.extract_strided_slice %55 {offsets = [0, 1], sizes = [8, 1], strides = [1, 1]} : vector<8x2xf32> to vector<8x1xf32>
    %c1_27 = arith.constant 1 : index
    %c0_28 = arith.constant 0 : index
    %66 = vector.load %arg7[%c1_27, %c0_28] : memref<2x64xf32, #tpu.memory_space<vmem>>, vector<1x64xf32>
    %67 = vector.broadcast %65 : vector<8x1xf32> to vector<8x64xf32>
    %68 = vector.broadcast %66 : vector<1x64xf32> to vector<8x64xf32>
    %69 = arith.mulf %67, %68 : vector<8x64xf32>
    %70 = arith.addf %64, %69 : vector<8x64xf32>
    %c0_29 = arith.constant 0 : index
    %c0_30 = arith.constant 0 : index
    %71 = vector.load %arg8[%c0_29, %c0_30] : memref<1x64xf32, #tpu.memory_space<vmem>>, vector<1x64xf32>
    %72 = vector.broadcast %71 : vector<1x64xf32> to vector<8x64xf32>
    %73 = arith.addf %70, %72 : vector<8x64xf32>
    %cst_31 = arith.constant 2.000000e+01 : f32
    %74 = vector.broadcast %cst_31 : f32 to vector<8x64xf32>
    %75 = arith.cmpf ogt, %73, %74 : vector<8x64xf32>
    %cst_32 = arith.constant 2.000000e+01 : f32
    %76 = vector.broadcast %cst_32 : f32 to vector<8x64xf32>
    %77 = arith.minimumf %73, %76 : vector<8x64xf32>
    %78 = math.exp %77 : vector<8x64xf32>
    %79 = math.log1p %78 : vector<8x64xf32>
    %80 = arith.select %75, %73, %79 : vector<8x64xi1>, vector<8x64xf32>
    %c0_33 = arith.constant 0 : index
    %c0_34 = arith.constant 0 : index
    %81 = vector.load %arg9[%c0_33, %c0_34] : memref<16x64xf32, #tpu.memory_space<vmem>>, vector<16x64xf32>
    %82 = arith.mulf %80, %52 : vector<8x64xf32>
    %83 = vector.shape_cast %56 : vector<8x16xf32> to vector<8x16x1xf32>
    %84 = vector.shape_cast %57 : vector<8x16xf32> to vector<8x16x1xf32>
    %cst_35 = arith.constant 0.000000e+00 : f32
    %85 = vector.broadcast %cst_35 : f32 to vector<16x64xf32>
    %86 = vector.extract_strided_slice %80 {offsets = [0, 0], sizes = [1, 64], strides = [1, 1]} : vector<8x64xf32> to vector<1x64xf32>
    %87 = vector.broadcast %86 : vector<1x64xf32> to vector<16x64xf32>
    %88 = arith.mulf %87, %81 : vector<16x64xf32>
    %89 = math.exp %88 : vector<16x64xf32>
    %90 = vector.extract_strided_slice %82 {offsets = [0, 0], sizes = [1, 64], strides = [1, 1]} : vector<8x64xf32> to vector<1x64xf32>
    %91 = vector.extract_strided_slice %83 {offsets = [0, 0, 0], sizes = [1, 16, 1], strides = [1, 1, 1]} : vector<8x16x1xf32> to vector<1x16x1xf32>
    %92 = vector.shape_cast %91 : vector<1x16x1xf32> to vector<16x1xf32>
    %93 = vector.broadcast %90 : vector<1x64xf32> to vector<16x64xf32>
    %94 = vector.broadcast %92 : vector<16x1xf32> to vector<16x64xf32>
    %95 = arith.mulf %93, %94 : vector<16x64xf32>
    %96 = arith.mulf %89, %85 : vector<16x64xf32>
    %97 = arith.addf %96, %95 : vector<16x64xf32>
    %98 = vector.extract_strided_slice %84 {offsets = [0, 0, 0], sizes = [1, 16, 1], strides = [1, 1, 1]} : vector<8x16x1xf32> to vector<1x16x1xf32>
    %99 = vector.shape_cast %98 : vector<1x16x1xf32> to vector<16x1xf32>
    %100 = vector.broadcast %99 : vector<16x1xf32> to vector<16x64xf32>
    %101 = arith.mulf %97, %100 : vector<16x64xf32>
    %cst_36 = arith.constant dense<0.000000e+00> : vector<64xf32>
    %102 = vector.multi_reduction <add>, %101, %cst_36 [0] : vector<16x64xf32> to vector<64xf32>
    %103 = vector.shape_cast %102 : vector<64xf32> to vector<1x64xf32>
    %104 = vector.extract_strided_slice %80 {offsets = [1, 0], sizes = [1, 64], strides = [1, 1]} : vector<8x64xf32> to vector<1x64xf32>
    %105 = vector.broadcast %104 : vector<1x64xf32> to vector<16x64xf32>
    %106 = arith.mulf %105, %81 : vector<16x64xf32>
    %107 = math.exp %106 : vector<16x64xf32>
    %108 = vector.extract_strided_slice %82 {offsets = [1, 0], sizes = [1, 64], strides = [1, 1]} : vector<8x64xf32> to vector<1x64xf32>
    %109 = vector.extract_strided_slice %83 {offsets = [1, 0, 0], sizes = [1, 16, 1], strides = [1, 1, 1]} : vector<8x16x1xf32> to vector<1x16x1xf32>
    %110 = vector.shape_cast %109 : vector<1x16x1xf32> to vector<16x1xf32>
    %111 = vector.broadcast %108 : vector<1x64xf32> to vector<16x64xf32>
    %112 = vector.broadcast %110 : vector<16x1xf32> to vector<16x64xf32>
    %113 = arith.mulf %111, %112 : vector<16x64xf32>
    %114 = arith.mulf %107, %97 : vector<16x64xf32>
    %115 = arith.addf %114, %113 : vector<16x64xf32>
    %116 = vector.extract_strided_slice %84 {offsets = [1, 0, 0], sizes = [1, 16, 1], strides = [1, 1, 1]} : vector<8x16x1xf32> to vector<1x16x1xf32>
    %117 = vector.shape_cast %116 : vector<1x16x1xf32> to vector<16x1xf32>
    %118 = vector.broadcast %117 : vector<16x1xf32> to vector<16x64xf32>
    %119 = arith.mulf %115, %118 : vector<16x64xf32>
    %cst_37 = arith.constant dense<0.000000e+00> : vector<64xf32>
    %120 = vector.multi_reduction <add>, %119, %cst_37 [0] : vector<16x64xf32> to vector<64xf32>
    %121 = vector.shape_cast %120 : vector<64xf32> to vector<1x64xf32>
    %122 = vector.extract_strided_slice %80 {offsets = [2, 0], sizes = [1, 64], strides = [1, 1]} : vector<8x64xf32> to vector<1x64xf32>
    %123 = vector.broadcast %122 : vector<1x64xf32> to vector<16x64xf32>
    %124 = arith.mulf %123, %81 : vector<16x64xf32>
    %125 = math.exp %124 : vector<16x64xf32>
    %126 = vector.extract_strided_slice %82 {offsets = [2, 0], sizes = [1, 64], strides = [1, 1]} : vector<8x64xf32> to vector<1x64xf32>
    %127 = vector.extract_strided_slice %83 {offsets = [2, 0, 0], sizes = [1, 16, 1], strides = [1, 1, 1]} : vector<8x16x1xf32> to vector<1x16x1xf32>
    %128 = vector.shape_cast %127 : vector<1x16x1xf32> to vector<16x1xf32>
    %129 = vector.broadcast %126 : vector<1x64xf32> to vector<16x64xf32>
    %130 = vector.broadcast %128 : vector<16x1xf32> to vector<16x64xf32>
    %131 = arith.mulf %129, %130 : vector<16x64xf32>
    %132 = arith.mulf %125, %115 : vector<16x64xf32>
    %133 = arith.addf %132, %131 : vector<16x64xf32>
    %134 = vector.extract_strided_slice %84 {offsets = [2, 0, 0], sizes = [1, 16, 1], strides = [1, 1, 1]} : vector<8x16x1xf32> to vector<1x16x1xf32>
    %135 = vector.shape_cast %134 : vector<1x16x1xf32> to vector<16x1xf32>
    %136 = vector.broadcast %135 : vector<16x1xf32> to vector<16x64xf32>
    %137 = arith.mulf %133, %136 : vector<16x64xf32>
    %cst_38 = arith.constant dense<0.000000e+00> : vector<64xf32>
    %138 = vector.multi_reduction <add>, %137, %cst_38 [0] : vector<16x64xf32> to vector<64xf32>
    %139 = vector.shape_cast %138 : vector<64xf32> to vector<1x64xf32>
    %140 = vector.extract_strided_slice %80 {offsets = [3, 0], sizes = [1, 64], strides = [1, 1]} : vector<8x64xf32> to vector<1x64xf32>
    %141 = vector.broadcast %140 : vector<1x64xf32> to vector<16x64xf32>
    %142 = arith.mulf %141, %81 : vector<16x64xf32>
    %143 = math.exp %142 : vector<16x64xf32>
    %144 = vector.extract_strided_slice %82 {offsets = [3, 0], sizes = [1, 64], strides = [1, 1]} : vector<8x64xf32> to vector<1x64xf32>
    %145 = vector.extract_strided_slice %83 {offsets = [3, 0, 0], sizes = [1, 16, 1], strides = [1, 1, 1]} : vector<8x16x1xf32> to vector<1x16x1xf32>
    %146 = vector.shape_cast %145 : vector<1x16x1xf32> to vector<16x1xf32>
    %147 = vector.broadcast %144 : vector<1x64xf32> to vector<16x64xf32>
    %148 = vector.broadcast %146 : vector<16x1xf32> to vector<16x64xf32>
    %149 = arith.mulf %147, %148 : vector<16x64xf32>
    %150 = arith.mulf %143, %133 : vector<16x64xf32>
    %151 = arith.addf %150, %149 : vector<16x64xf32>
    %152 = vector.extract_strided_slice %84 {offsets = [3, 0, 0], sizes = [1, 16, 1], strides = [1, 1, 1]} : vector<8x16x1xf32> to vector<1x16x1xf32>
    %153 = vector.shape_cast %152 : vector<1x16x1xf32> to vector<16x1xf32>
    %154 = vector.broadcast %153 : vector<16x1xf32> to vector<16x64xf32>
    %155 = arith.mulf %151, %154 : vector<16x64xf32>
    %cst_39 = arith.constant dense<0.000000e+00> : vector<64xf32>
    %156 = vector.multi_reduction <add>, %155, %cst_39 [0] : vector<16x64xf32> to vector<64xf32>
    %157 = vector.shape_cast %156 : vector<64xf32> to vector<1x64xf32>
    %158 = vector.extract_strided_slice %80 {offsets = [4, 0], sizes = [1, 64], strides = [1, 1]} : vector<8x64xf32> to vector<1x64xf32>
    %159 = vector.broadcast %158 : vector<1x64xf32> to vector<16x64xf32>
    %160 = arith.mulf %159, %81 : vector<16x64xf32>
    %161 = math.exp %160 : vector<16x64xf32>
    %162 = vector.extract_strided_slice %82 {offsets = [4, 0], sizes = [1, 64], strides = [1, 1]} : vector<8x64xf32> to vector<1x64xf32>
    %163 = vector.extract_strided_slice %83 {offsets = [4, 0, 0], sizes = [1, 16, 1], strides = [1, 1, 1]} : vector<8x16x1xf32> to vector<1x16x1xf32>
    %164 = vector.shape_cast %163 : vector<1x16x1xf32> to vector<16x1xf32>
    %165 = vector.broadcast %162 : vector<1x64xf32> to vector<16x64xf32>
    %166 = vector.broadcast %164 : vector<16x1xf32> to vector<16x64xf32>
    %167 = arith.mulf %165, %166 : vector<16x64xf32>
    %168 = arith.mulf %161, %151 : vector<16x64xf32>
    %169 = arith.addf %168, %167 : vector<16x64xf32>
    %170 = vector.extract_strided_slice %84 {offsets = [4, 0, 0], sizes = [1, 16, 1], strides = [1, 1, 1]} : vector<8x16x1xf32> to vector<1x16x1xf32>
    %171 = vector.shape_cast %170 : vector<1x16x1xf32> to vector<16x1xf32>
    %172 = vector.broadcast %171 : vector<16x1xf32> to vector<16x64xf32>
    %173 = arith.mulf %169, %172 : vector<16x64xf32>
    %cst_40 = arith.constant dense<0.000000e+00> : vector<64xf32>
    %174 = vector.multi_reduction <add>, %173, %cst_40 [0] : vector<16x64xf32> to vector<64xf32>
    %175 = vector.shape_cast %174 : vector<64xf32> to vector<1x64xf32>
    %176 = vector.extract_strided_slice %80 {offsets = [5, 0], sizes = [1, 64], strides = [1, 1]} : vector<8x64xf32> to vector<1x64xf32>
    %177 = vector.broadcast %176 : vector<1x64xf32> to vector<16x64xf32>
    %178 = arith.mulf %177, %81 : vector<16x64xf32>
    %179 = math.exp %178 : vector<16x64xf32>
    %180 = vector.extract_strided_slice %82 {offsets = [5, 0], sizes = [1, 64], strides = [1, 1]} : vector<8x64xf32> to vector<1x64xf32>
    %181 = vector.extract_strided_slice %83 {offsets = [5, 0, 0], sizes = [1, 16, 1], strides = [1, 1, 1]} : vector<8x16x1xf32> to vector<1x16x1xf32>
    %182 = vector.shape_cast %181 : vector<1x16x1xf32> to vector<16x1xf32>
    %183 = vector.broadcast %180 : vector<1x64xf32> to vector<16x64xf32>
    %184 = vector.broadcast %182 : vector<16x1xf32> to vector<16x64xf32>
    %185 = arith.mulf %183, %184 : vector<16x64xf32>
    %186 = arith.mulf %179, %169 : vector<16x64xf32>
    %187 = arith.addf %186, %185 : vector<16x64xf32>
    %188 = vector.extract_strided_slice %84 {offsets = [5, 0, 0], sizes = [1, 16, 1], strides = [1, 1, 1]} : vector<8x16x1xf32> to vector<1x16x1xf32>
    %189 = vector.shape_cast %188 : vector<1x16x1xf32> to vector<16x1xf32>
    %190 = vector.broadcast %189 : vector<16x1xf32> to vector<16x64xf32>
    %191 = arith.mulf %187, %190 : vector<16x64xf32>
    %cst_41 = arith.constant dense<0.000000e+00> : vector<64xf32>
    %192 = vector.multi_reduction <add>, %191, %cst_41 [0] : vector<16x64xf32> to vector<64xf32>
    %193 = vector.shape_cast %192 : vector<64xf32> to vector<1x64xf32>
    %194 = vector.extract_strided_slice %80 {offsets = [6, 0], sizes = [1, 64], strides = [1, 1]} : vector<8x64xf32> to vector<1x64xf32>
    %195 = vector.broadcast %194 : vector<1x64xf32> to vector<16x64xf32>
    %196 = arith.mulf %195, %81 : vector<16x64xf32>
    %197 = math.exp %196 : vector<16x64xf32>
    %198 = vector.extract_strided_slice %82 {offsets = [6, 0], sizes = [1, 64], strides = [1, 1]} : vector<8x64xf32> to vector<1x64xf32>
    %199 = vector.extract_strided_slice %83 {offsets = [6, 0, 0], sizes = [1, 16, 1], strides = [1, 1, 1]} : vector<8x16x1xf32> to vector<1x16x1xf32>
    %200 = vector.shape_cast %199 : vector<1x16x1xf32> to vector<16x1xf32>
    %201 = vector.broadcast %198 : vector<1x64xf32> to vector<16x64xf32>
    %202 = vector.broadcast %200 : vector<16x1xf32> to vector<16x64xf32>
    %203 = arith.mulf %201, %202 : vector<16x64xf32>
    %204 = arith.mulf %197, %187 : vector<16x64xf32>
    %205 = arith.addf %204, %203 : vector<16x64xf32>
    %206 = vector.extract_strided_slice %84 {offsets = [6, 0, 0], sizes = [1, 16, 1], strides = [1, 1, 1]} : vector<8x16x1xf32> to vector<1x16x1xf32>
    %207 = vector.shape_cast %206 : vector<1x16x1xf32> to vector<16x1xf32>
    %208 = vector.broadcast %207 : vector<16x1xf32> to vector<16x64xf32>
    %209 = arith.mulf %205, %208 : vector<16x64xf32>
    %cst_42 = arith.constant dense<0.000000e+00> : vector<64xf32>
    %210 = vector.multi_reduction <add>, %209, %cst_42 [0] : vector<16x64xf32> to vector<64xf32>
    %211 = vector.shape_cast %210 : vector<64xf32> to vector<1x64xf32>
    %212 = vector.extract_strided_slice %80 {offsets = [7, 0], sizes = [1, 64], strides = [1, 1]} : vector<8x64xf32> to vector<1x64xf32>
    %213 = vector.broadcast %212 : vector<1x64xf32> to vector<16x64xf32>
    %214 = arith.mulf %213, %81 : vector<16x64xf32>
    %215 = math.exp %214 : vector<16x64xf32>
    %216 = vector.extract_strided_slice %82 {offsets = [7, 0], sizes = [1, 64], strides = [1, 1]} : vector<8x64xf32> to vector<1x64xf32>
    %217 = vector.extract_strided_slice %83 {offsets = [7, 0, 0], sizes = [1, 16, 1], strides = [1, 1, 1]} : vector<8x16x1xf32> to vector<1x16x1xf32>
    %218 = vector.shape_cast %217 : vector<1x16x1xf32> to vector<16x1xf32>
    %219 = vector.broadcast %216 : vector<1x64xf32> to vector<16x64xf32>
    %220 = vector.broadcast %218 : vector<16x1xf32> to vector<16x64xf32>
    %221 = arith.mulf %219, %220 : vector<16x64xf32>
    %222 = arith.mulf %215, %205 : vector<16x64xf32>
    %223 = arith.addf %222, %221 : vector<16x64xf32>
    %224 = vector.extract_strided_slice %84 {offsets = [7, 0, 0], sizes = [1, 16, 1], strides = [1, 1, 1]} : vector<8x16x1xf32> to vector<1x16x1xf32>
    %225 = vector.shape_cast %224 : vector<1x16x1xf32> to vector<16x1xf32>
    %226 = vector.broadcast %225 : vector<16x1xf32> to vector<16x64xf32>
    %227 = arith.mulf %223, %226 : vector<16x64xf32>
    %cst_43 = arith.constant dense<0.000000e+00> : vector<64xf32>
    %228 = vector.multi_reduction <add>, %227, %cst_43 [0] : vector<16x64xf32> to vector<64xf32>
    %229 = vector.shape_cast %228 : vector<64xf32> to vector<1x64xf32>
    %230 = tpu.concatenate %103, %121, %139, %157, %175, %193, %211, %229 in 0 : vector<1x64xf32>, vector<1x64xf32>, vector<1x64xf32>, vector<1x64xf32>, vector<1x64xf32>, vector<1x64xf32>, vector<1x64xf32>, vector<1x64xf32> -> vector<8x64xf32>
    %c0_44 = arith.constant 0 : index
    %c0_45 = arith.constant 0 : index
    %231 = vector.load %arg10[%c0_44, %c0_45] : memref<1x64xf32, #tpu.memory_space<vmem>>, vector<1x64xf32>
    %232 = vector.broadcast %231 : vector<1x64xf32> to vector<8x64xf32>
    %233 = arith.mulf %52, %232 : vector<8x64xf32>
    %234 = arith.addf %230, %233 : vector<8x64xf32>
    %cst_46 = arith.constant 0.000000e+00 : f32
    %235 = vector.broadcast %cst_46 : f32 to vector<8x64xf32>
    %236 = arith.subf %235, %18 : vector<8x64xf32>
    %237 = math.exp %236 : vector<8x64xf32>
    %cst_47 = arith.constant 1.000000e+00 : f32
    %238 = vector.broadcast %cst_47 : f32 to vector<8x64xf32>
    %239 = arith.addf %238, %237 : vector<8x64xf32>
    %cst_48 = arith.constant 1.000000e+00 : f32
    %240 = vector.broadcast %cst_48 : f32 to vector<8x64xf32>
    %241 = arith.divf %240, %239 : vector<8x64xf32>
    %242 = arith.mulf %18, %241 : vector<8x64xf32>
    %243 = arith.mulf %234, %242 : vector<8x64xf32>
    %c0_49 = arith.constant 0 : index
    %c0_50 = arith.constant 0 : index
    %244 = vector.load %arg11[%c0_49, %c0_50] : memref<64x32xf32, #tpu.memory_space<vmem>>, vector<64x32xf32>
    %cst_51 = arith.constant dense<0.000000e+00> : vector<8x32xf32>
    %245 = tpu.matmul %243, %244, %cst_51 {dimension_numbers = #tpu.dot_dimension_numbers<[1], [0], [0], [1], [0, 0, 1, 1], [], []>} : vector<8x64xf32>, vector<64x32xf32>, vector<8x32xf32> -> vector<8x32xf32>
    %246 = arith.addf %245, %1 : vector<8x32xf32>
    %c0_52 = arith.constant 0 : index
    %c0_53 = arith.constant 0 : index
    %c0_54 = arith.constant 0 : index
    %247 = vector.load %arg12[%c0_52, %c0_53, %c0_54] : memref<1x8x32xf32, #tpu.memory_space<vmem>>, vector<1x8x32xf32>
    %248 = vector.shape_cast %247 : vector<1x8x32xf32> to vector<8x32xf32>
    %249 = vector.shape_cast %246 : vector<8x32xf32> to vector<1x8x32xf32>
    tpu.vector_store %arg12[%c0_52, %c0_53, %c0_54], %249 {strides = array<i32>} : memref<1x8x32xf32, #tpu.memory_space<vmem>>, vector<1x8x32xf32>,
    return
  }
  func.func @transform_0(%arg0: i32) -> (i32, i32, i32) {
    %c0_i32 = arith.constant 0 : i32
    %c0_i32_0 = arith.constant 0 : i32
    %c0_i32_1 = arith.constant 0 : i32
    return %arg0, %c0_i32, %c0_i32_0 : i32, i32, i32
  }
  func.func @transform_1(%arg0: i32) -> (i32, i32) {
    %c0_i32 = arith.constant 0 : i32
    %c0_i32_0 = arith.constant 0 : i32
    %c0_i32_1 = arith.constant 0 : i32
    return %c0_i32, %c0_i32_0 : i32, i32
  }
  func.func @transform_2(%arg0: i32) -> (i32, i32) {
    %c0_i32 = arith.constant 0 : i32
    %c0_i32_0 = arith.constant 0 : i32
    %c0_i32_1 = arith.constant 0 : i32
    return %c0_i32, %c0_i32_0 : i32, i32
  }
  func.func @transform_3(%arg0: i32) -> (i32, i32) {
    %c0_i32 = arith.constant 0 : i32
    %c0_i32_0 = arith.constant 0 : i32
    %c0_i32_1 = arith.constant 0 : i32
    return %c0_i32, %c0_i32_0 : i32, i32
  }
  func.func @transform_4(%arg0: i32) -> (i32, i32) {
    %c0_i32 = arith.constant 0 : i32
    %c0_i32_0 = arith.constant 0 : i32
    %c0_i32_1 = arith.constant 0 : i32
    return %c0_i32, %c0_i32_0 : i32, i32
  }
  func.func @transform_5(%arg0: i32) -> (i32, i32) {
    %c0_i32 = arith.constant 0 : i32
    %c0_i32_0 = arith.constant 0 : i32
    %c0_i32_1 = arith.constant 0 : i32
    return %c0_i32, %c0_i32_0 : i32, i32
  }
  func.func @transform_6(%arg0: i32) -> (i32, i32) {
    %c0_i32 = arith.constant 0 : i32
    %c0_i32_0 = arith.constant 0 : i32
    %c0_i32_1 = arith.constant 0 : i32
    return %c0_i32, %c0_i32_0 : i32, i32
  }
  func.func @transform_7(%arg0: i32) -> (i32, i32) {
    %c0_i32 = arith.constant 0 : i32
    %c0_i32_0 = arith.constant 0 : i32
    %c0_i32_1 = arith.constant 0 : i32
    return %c0_i32, %c0_i32_0 : i32, i32
  }
  func.func @transform_8(%arg0: i32) -> (i32, i32) {
    %c0_i32 = arith.constant 0 : i32
    %c0_i32_0 = arith.constant 0 : i32
    %c0_i32_1 = arith.constant 0 : i32
    return %c0_i32, %c0_i32_0 : i32, i32
  }
  func.func @transform_9(%arg0: i32) -> (i32, i32) {
    %c0_i32 = arith.constant 0 : i32
    %c0_i32_0 = arith.constant 0 : i32
    %c0_i32_1 = arith.constant 0 : i32
    return %c0_i32, %c0_i32_0 : i32, i32
  }
  func.func @transform_10(%arg0: i32) -> (i32, i32) {
    %c0_i32 = arith.constant 0 : i32
    %c0_i32_0 = arith.constant 0 : i32
    %c0_i32_1 = arith.constant 0 : i32
    return %c0_i32, %c0_i32_0 : i32, i32
  }
  func.func @transform_11(%arg0: i32) -> (i32, i32, i32) {
    %c0_i32 = arith.constant 0 : i32
    %c0_i32_0 = arith.constant 0 : i32
    %c0_i32_1 = arith.constant 0 : i32
    return %arg0, %c0_i32, %c0_i32_0 : i32, i32, i32
  }
}

</mosaic_0001>

<llo_original>
// kernel: tpu_custom_call.1
$region0: #{tpu_custom_call.1}
  #allocation0 [shape = 'u32[]', space=smem, size = 0x4, offset = 0x4, fixed_abs, tag = 'smem constant byte address 0x4 - core index']
  #allocation1 [shape = 'u32[144,128]{1,0:T(1,128)}', space=vmem, size = 0x12000, scoped, tag = 'internal scratch']
  %s0 = inlined_call_operand.vmem [shape: f32[2,8,32], index: 0, kind: input, shape index: {}]
  %s1 = inlined_call_operand.vmem [shape: f32[1,32], index: 1, kind: input, shape index: {}]
  %s2 = inlined_call_operand.vmem [shape: f32[32,128], index: 2, kind: input, shape index: {}]
  %s3 = inlined_call_operand.vmem [shape: f32[4,64], index: 3, kind: input, shape index: {}]
  %s4 = inlined_call_operand.vmem [shape: f32[1,64], index: 4, kind: input, shape index: {}]
  %s5 = inlined_call_operand.vmem [shape: f32[64,34], index: 5, kind: input, shape index: {}]
  %s6 = inlined_call_operand.vmem [shape: f32[2,64], index: 6, kind: input, shape index: {}]
  %s7 = inlined_call_operand.vmem [shape: f32[1,64], index: 7, kind: input, shape index: {}]
  %s8 = inlined_call_operand.vmem [shape: f32[16,64], index: 8, kind: input, shape index: {}]
  %s9 = inlined_call_operand.vmem [shape: f32[1,64], index: 9, kind: input, shape index: {}]
  %s10 = inlined_call_operand.vmem [shape: f32[64,32], index: 10, kind: input, shape index: {}]
  %s11 = inlined_call_operand.hbm [shape: f32[2,8,32], index: 11, kind: output, shape index: {}]
  %s12 = sld [smem:[#allocation0]]
  $region77: #{tpu_custom_call.1} parent=0
    _
  %s14 = ssub.s32 1, %s12
  %s15 = scalar_select 0, %s14, %s12
  $region1: #{tpu_custom_call.1} parent=0
    #allocation2 [shape = 'u8[8192]{0}', space=vmem, size = 0x2000, scoped, tag = 'output window, operand 0']
    #allocation3 [shape = 's32[2]{0}', space=sflag, size = 0x8, scoped, tag = 'scoped memory for tpu_custom_call.1']
    %16 = vsyncpa [#allocation3], 0
    %s17 = scalar_lea.sflag [#allocation3], 1
    %18 = vsyncpa %s17, 0
    loop: start=0, step=1, limit=4
    $region2: #{tpu_custom_call.1} parent=1 // loop_pre_header
      _
    $region3: #{tpu_custom_call.1} parent=1 // loop_header
      %s20 = sphi 0, %s24
      %p21 = scmp.ge.s32.totalorder %s20, 4
      %s30 = sphi 0, %s32
      %s33 = sphi 0, %s30
      %s34 = sphi 0, %s33
      %s50 = sphi 0, %s34
      %s54 = sphi 0, %s54
      %s56 = sphi 0, %s54
      %s57 = sphi 0, %s56
      %s71 = sphi 0, %s57
      %s75 = sphi 0, %s75
      %s77 = sphi 0, %s75
      %s78 = sphi 0, %s77
      %s92 = sphi 0, %s78
      %s96 = sphi 0, %s96
      %s98 = sphi 0, %s96
      %s99 = sphi 0, %s98
      %s113 = sphi 0, %s99
      %s117 = sphi 0, %s117
      %s119 = sphi 0, %s117
      %s120 = sphi 0, %s119
      %s134 = sphi 0, %s120
      %s138 = sphi 0, %s138
      %s140 = sphi 0, %s138
      %s141 = sphi 0, %s140
      %s155 = sphi 0, %s141
      %s159 = sphi 0, %s159
      %s161 = sphi 0, %s159
      %s162 = sphi 0, %s161
      %s176 = sphi 0, %s162
      %s180 = sphi 0, %s180
      %s182 = sphi 0, %s180
      %s183 = sphi 0, %s182
      %s197 = sphi 0, %s183
      %s201 = sphi 0, %s201
      %s203 = sphi 0, %s201
      %s204 = sphi 0, %s203
      %s218 = sphi 0, %s204
      %s222 = sphi 0, %s222
      %s224 = sphi 0, %s222
      %s225 = sphi 0, %s224
      %s239 = sphi 0, %s225
      %s243 = sphi 0, %s243
      %s245 = sphi 0, %s243
      %s246 = sphi 0, %s245
      %s260 = sphi 0, %s246
      %s266 = sphi 0, %s268
      %s269 = sphi 0, %s266
      %s270 = sphi 0, %s269
      %s286 = sphi 0, %s270
    $region4: #{tpu_custom_call.1} parent=1 // loop_header_branch
      %23 = sbr.rel (%p21) target = $region8
    $region5: #{tpu_custom_call.1} parent=1 // loop_body
      %s25 = ssub.s32 %s20, 1
      %s26 = ssub.s32 %s20, 2
      %s27 = sadd.s32 %s20, 1
      %s28 = ssub.s32 %s20, %s27
      %p29 = scmp.eq.s32.totalorder %s28, 0
      %s31 = sadd.s32 %s30, 1
      %s32 = scalar_select %p29, %s30, %s31
      %p35 = pneg %p29
      %p36 = scmp.eq.s32.totalorder %s20, 1
      %p37 = por %p35, %p36
      %p38 = scmp.ne.s32.totalorder %s30, %s33
      %p39 = scmp.eq.s32.totalorder %s20, 0
      %p40 = por %p38, %p39
      %p41 = scmp.ne.s32.totalorder %s30, %s33
      %p42 = scmp.eq.s32.totalorder %s25, 1
      %p43 = por %p41, %p42
      %p44 = scmp.ne.s32.totalorder %s33, %s34
      %p45 = scmp.eq.s32.totalorder %s25, 0
      %p46 = por %p44, %p45
      %p47 = scmp.ne.s32.totalorder %s33, %s34
      %p48 = scmp.eq.s32.totalorder %s26, 1
      %p49 = por %p47, %p48
      %p51 = scmp.ne.s32.totalorder %s34, %s50
      %p52 = scmp.eq.s32.totalorder %s26, 0
      %p53 = por %p51, %p52
      %s55 = sadd.s32 %s54, 1
      %p58 = scmp.eq.s32.totalorder %s20, 1
      %p59 = scmp.ne.s32.totalorder %s54, %s56
      %p60 = scmp.eq.s32.totalorder %s20, 0
      %p61 = por %p59, %p60
      %p62 = scmp.ne.s32.totalorder %s54, %s56
      %p63 = scmp.eq.s32.totalorder %s25, 1
      %p64 = por %p62, %p63
      %p65 = scmp.ne.s32.totalorder %s56, %s57
      %p66 = scmp.eq.s32.totalorder %s25, 0
      %p67 = por %p65, %p66
      %p68 = scmp.ne.s32.totalorder %s56, %s57
      %p69 = scmp.eq.s32.totalorder %s26, 1
      %p70 = por %p68, %p69
      %p72 = scmp.ne.s32.totalorder %s57, %s71
      %p73 = scmp.eq.s32.totalorder %s26, 0
      %p74 = por %p72, %p73
      %s76 = sadd.s32 %s75, 1
      %p79 = scmp.eq.s32.totalorder %s20, 1
      %p80 = scmp.ne.s32.totalorder %s75, %s77
      %p81 = scmp.eq.s32.totalorder %s20, 0
      %p82 = por %p80, %p81
      %p83 = scmp.ne.s32.totalorder %s75, %s77
      %p84 = scmp.eq.s32.totalorder %s25, 1
      %p85 = por %p83, %p84
      %p86 = scmp.ne.s32.totalorder %s77, %s78
      %p87 = scmp.eq.s32.totalorder %s25, 0
      %p88 = por %p86, %p87
      %p89 = scmp.ne.s32.totalorder %s77, %s78
      %p90 = scmp.eq.s32.totalorder %s26, 1
      %p91 = por %p89, %p90
      %p93 = scmp.ne.s32.totalorder %s78, %s92
      %p94 = scmp.eq.s32.totalorder %s26, 0
      %p95 = por %p93, %p94
      %s97 = sadd.s32 %s96, 1
      %p100 = scmp.eq.s32.totalorder %s20, 1
      %p101 = scmp.ne.s32.totalorder %s96, %s98
      %p102 = scmp.eq.s32.totalorder %s20, 0
      %p103 = por %p101, %p102
      %p104 = scmp.ne.s32.totalorder %s96, %s98
      %p105 = scmp.eq.s32.totalorder %s25, 1
      %p106 = por %p104, %p105
      %p107 = scmp.ne.s32.totalorder %s98, %s99
      %p108 = scmp.eq.s32.totalorder %s25, 0
      %p109 = por %p107, %p108
      %p110 = scmp.ne.s32.totalorder %s98, %s99
      %p111 = scmp.eq.s32.totalorder %s26, 1
      %p112 = por %p110, %p111
      %p114 = scmp.ne.s32.totalorder %s99, %s113
      %p115 = scmp.eq.s32.totalorder %s26, 0
      %p116 = por %p114, %p115
      %s118 = sadd.s32 %s117, 1
      %p121 = scmp.eq.s32.totalorder %s20, 1
      %p122 = scmp.ne.s32.totalorder %s117, %s119
      %p123 = scmp.eq.s32.totalorder %s20, 0
      %p124 = por %p122, %p123
      %p125 = scmp.ne.s32.totalorder %s117, %s119
      %p126 = scmp.eq.s32.totalorder %s25, 1
      %p127 = por %p125, %p126
      %p128 = scmp.ne.s32.totalorder %s119, %s120
      %p129 = scmp.eq.s32.totalorder %s25, 0
      %p130 = por %p128, %p129
      %p131 = scmp.ne.s32.totalorder %s119, %s120
      %p132 = scmp.eq.s32.totalorder %s26, 1
      %p133 = por %p131, %p132
      %p135 = scmp.ne.s32.totalorder %s120, %s134
      %p136 = scmp.eq.s32.totalorder %s26, 0
      %p137 = por %p135, %p136
      %s139 = sadd.s32 %s138, 1
      %p142 = scmp.eq.s32.totalorder %s20, 1
      %p143 = scmp.ne.s32.totalorder %s138, %s140
      %p144 = scmp.eq.s32.totalorder %s20, 0
      %p145 = por %p143, %p144
      %p146 = scmp.ne.s32.totalorder %s138, %s140
      %p147 = scmp.eq.s32.totalorder %s25, 1
      %p148 = por %p146, %p147
      %p149 = scmp.ne.s32.totalorder %s140, %s141
      %p150 = scmp.eq.s32.totalorder %s25, 0
      %p151 = por %p149, %p150
      %p152 = scmp.ne.s32.totalorder %s140, %s141
      %p153 = scmp.eq.s32.totalorder %s26, 1
      %p154 = por %p152, %p153
      %p156 = scmp.ne.s32.totalorder %s141, %s155
      %p157 = scmp.eq.s32.totalorder %s26, 0
      %p158 = por %p156, %p157
      %s160 = sadd.s32 %s159, 1
      %p163 = scmp.eq.s32.totalorder %s20, 1
      %p164 = scmp.ne.s32.totalorder %s159, %s161
      %p165 = scmp.eq.s32.totalorder %s20, 0
      %p166 = por %p164, %p165
      %p167 = scmp.ne.s32.totalorder %s159, %s161
      %p168 = scmp.eq.s32.totalorder %s25, 1
      %p169 = por %p167, %p168
      %p170 = scmp.ne.s32.totalorder %s161, %s162
      %p171 = scmp.eq.s32.totalorder %s25, 0
      %p172 = por %p170, %p171
      %p173 = scmp.ne.s32.totalorder %s161, %s162
      %p174 = scmp.eq.s32.totalorder %s26, 1
      %p175 = por %p173, %p174
      %p177 = scmp.ne.s32.totalorder %s162, %s176
      %p178 = scmp.eq.s32.totalorder %s26, 0
      %p179 = por %p177, %p178
      %s181 = sadd.s32 %s180, 1
      %p184 = scmp.eq.s32.totalorder %s20, 1
      %p185 = scmp.ne.s32.totalorder %s180, %s182
      %p186 = scmp.eq.s32.totalorder %s20, 0
      %p187 = por %p185, %p186
      %p188 = scmp.ne.s32.totalorder %s180, %s182
      %p189 = scmp.eq.s32.totalorder %s25, 1
      %p190 = por %p188, %p189
      %p191 = scmp.ne.s32.totalorder %s182, %s183
      %p192 = scmp.eq.s32.totalorder %s25, 0
      %p193 = por %p191, %p192
      %p194 = scmp.ne.s32.totalorder %s182, %s183
      %p195 = scmp.eq.s32.totalorder %s26, 1
      %p196 = por %p194, %p195
      %p198 = scmp.ne.s32.totalorder %s183, %s197
      %p199 = scmp.eq.s32.totalorder %s26, 0
      %p200 = por %p198, %p199
      %s202 = sadd.s32 %s201, 1
      %p205 = scmp.eq.s32.totalorder %s20, 1
      %p206 = scmp.ne.s32.totalorder %s201, %s203
      %p207 = scmp.eq.s32.totalorder %s20, 0
      %p208 = por %p206, %p207
      %p209 = scmp.ne.s32.totalorder %s201, %s203
      %p210 = scmp.eq.s32.totalorder %s25, 1
      %p211 = por %p209, %p210
      %p212 = scmp.ne.s32.totalorder %s203, %s204
      %p213 = scmp.eq.s32.totalorder %s25, 0
      %p214 = por %p212, %p213
      %p215 = scmp.ne.s32.totalorder %s203, %s204
      %p216 = scmp.eq.s32.totalorder %s26, 1
      %p217 = por %p215, %p216
      %p219 = scmp.ne.s32.totalorder %s204, %s218
      %p220 = scmp.eq.s32.totalorder %s26, 0
      %p221 = por %p219, %p220
      %s223 = sadd.s32 %s222, 1
      %p226 = scmp.eq.s32.totalorder %s20, 1
      %p227 = scmp.ne.s32.totalorder %s222, %s224
      %p228 = scmp.eq.s32.totalorder %s20, 0
      %p229 = por %p227, %p228
      %p230 = scmp.ne.s32.totalorder %s222, %s224
      %p231 = scmp.eq.s32.totalorder %s25, 1
      %p232 = por %p230, %p231
      %p233 = scmp.ne.s32.totalorder %s224, %s225
      %p234 = scmp.eq.s32.totalorder %s25, 0
      %p235 = por %p233, %p234
      %p236 = scmp.ne.s32.totalorder %s224, %s225
      %p237 = scmp.eq.s32.totalorder %s26, 1
      %p238 = por %p236, %p237
      %p240 = scmp.ne.s32.totalorder %s225, %s239
      %p241 = scmp.eq.s32.totalorder %s26, 0
      %p242 = por %p240, %p241
      %s244 = sadd.s32 %s243, 1
      %p247 = scmp.eq.s32.totalorder %s20, 1
      %p248 = scmp.ne.s32.totalorder %s243, %s245
      %p249 = scmp.eq.s32.totalorder %s20, 0
      %p250 = por %p248, %p249
      %p251 = scmp.ne.s32.totalorder %s243, %s245
      %p252 = scmp.eq.s32.totalorder %s25, 1
      %p253 = por %p251, %p252
      %p254 = scmp.ne.s32.totalorder %s245, %s246
      %p255 = scmp.eq.s32.totalorder %s25, 0
      %p256 = por %p254, %p255
      %p257 = scmp.ne.s32.totalorder %s245, %s246
      %p258 = scmp.eq.s32.totalorder %s26, 1
      %p259 = por %p257, %p258
      %p261 = scmp.ne.s32.totalorder %s246, %s260
      %p262 = scmp.eq.s32.totalorder %s26, 0
      %p263 = por %p261, %p262
      %s264 = ssub.s32 %s20, %s27
      %p265 = scmp.eq.s32.totalorder %s264, 0
      %s267 = sadd.s32 %s266, 1
      %s268 = scalar_select %p265, %s266, %s267
      %p271 = pneg %p265
      %p272 = scmp.eq.s32.totalorder %s20, 1
      %p273 = por %p271, %p272
      %p274 = scmp.ne.s32.totalorder %s266, %s269
      %p275 = scmp.eq.s32.totalorder %s20, 0
      %p276 = por %p274, %p275
      %p277 = scmp.ne.s32.totalorder %s266, %s269
      %p278 = scmp.eq.s32.totalorder %s25, 1
      %p279 = por %p277, %p278
      %p280 = scmp.ne.s32.totalorder %s269, %s270
      %p281 = scmp.eq.s32.totalorder %s25, 0
      %p282 = por %p280, %p281
      %p283 = scmp.ne.s32.totalorder %s269, %s270
      %p284 = scmp.eq.s32.totalorder %s26, 1
      %p285 = por %p283, %p284
      %p287 = scmp.ne.s32.totalorder %s270, %s286
      %p288 = scmp.eq.s32.totalorder %s26, 0
      %p289 = por %p287, %p288
      %p290 = scmp.le.s32.totalorder 1, %s20
      %p291 = scmp.lt.s32.totalorder %s20, 3
      %p292 = pnand %p290, %p291
      %p293 = pneg %p292
      // Predicated region
      $region9: #{tpu_custom_call.1} parent=5 // pred_check
        _
      $region10: #{tpu_custom_call.1} parent=5 // pred_check_branch
        %295 = sbr.rel (%p292) target = $region12
      $region11: #{tpu_custom_call.1} parent=5 // pred_region
        %s296 = ssub.s32 %s20, 1
        // Predicated region
        $region13: #{tpu_custom_call.1} parent=11 // pred_check
          %p297 = pneg %p67
        $region14: #{tpu_custom_call.1} parent=11 // pred_check_branch
          %299 = sbr.rel (%p297) target = $region16
        $region15: #{tpu_custom_call.1} parent=11 // pred_region
          _
        $region16: #{tpu_custom_call.1} parent=11 // pred_fallthru
          _
        // Predicated region
        $region17: #{tpu_custom_call.1} parent=11 // pred_check
          %p300 = pneg %p88
        $region18: #{tpu_custom_call.1} parent=11 // pred_check_branch
          %302 = sbr.rel (%p300) target = $region20
        $region19: #{tpu_custom_call.1} parent=11 // pred_region
          _
        $region20: #{tpu_custom_call.1} parent=11 // pred_fallthru
          _
        // Predicated region
        $region21: #{tpu_custom_call.1} parent=11 // pred_check
          %p303 = pneg %p109
        $region22: #{tpu_custom_call.1} parent=11 // pred_check_branch
          %305 = sbr.rel (%p303) target = $region24
        $region23: #{tpu_custom_call.1} parent=11 // pred_region
          _
        $region24: #{tpu_custom_call.1} parent=11 // pred_fallthru
          _
        // Predicated region
        $region25: #{tpu_custom_call.1} parent=11 // pred_check
          %p306 = pneg %p130
        $region26: #{tpu_custom_call.1} parent=11 // pred_check_branch
          %308 = sbr.rel (%p306) target = $region28
        $region27: #{tpu_custom_call.1} parent=11 // pred_region
          _
        $region28: #{tpu_custom_call.1} parent=11 // pred_fallthru
          _
        // Predicated region
        $region29: #{tpu_custom_call.1} parent=11 // pred_check
          %p309 = pneg %p151
        $region30: #{tpu_custom_call.1} parent=11 // pred_check_branch
          %311 = sbr.rel (%p309) target = $region32
        $region31: #{tpu_custom_call.1} parent=11 // pred_region
          _
        $region32: #{tpu_custom_call.1} parent=11 // pred_fallthru
          _
        // Predicated region
        $region33: #{tpu_custom_call.1} parent=11 // pred_check
          %p312 = pneg %p172
        $region34: #{tpu_custom_call.1} parent=11 // pred_check_branch
          %314 = sbr.rel (%p312) target = $region36
        $region35: #{tpu_custom_call.1} parent=11 // pred_region
          _
        $region36: #{tpu_custom_call.1} parent=11 // pred_fallthru
          _
        // Predicated region
        $region37: #{tpu_custom_call.1} parent=11 // pred_check
          %p315 = pneg %p193
        $region38: #{tpu_custom_call.1} parent=11 // pred_check_branch
          %317 = sbr.rel (%p315) target = $region40
        $region39: #{tpu_custom_call.1} parent=11 // pred_region
          _
        $region40: #{tpu_custom_call.1} parent=11 // pred_fallthru
          _
        // Predicated region
        $region41: #{tpu_custom_call.1} parent=11 // pred_check
          %p318 = pneg %p214
        $region42: #{tpu_custom_call.1} parent=11 // pred_check_branch
          %320 = sbr.rel (%p318) target = $region44
        $region43: #{tpu_custom_call.1} parent=11 // pred_region
          _
        $region44: #{tpu_custom_call.1} parent=11 // pred_fallthru
          _
        // Predicated region
        $region45: #{tpu_custom_call.1} parent=11 // pred_check
          %p321 = pneg %p235
        $region46: #{tpu_custom_call.1} parent=11 // pred_check_branch
          %323 = sbr.rel (%p321) target = $region48
        $region47: #{tpu_custom_call.1} parent=11 // pred_region
          _
        $region48: #{tpu_custom_call.1} parent=11 // pred_fallthru
          _
        // Predicated region
        $region49: #{tpu_custom_call.1} parent=11 // pred_check
          %p324 = pneg %p256
        $region50: #{tpu_custom_call.1} parent=11 // pred_check_branch
          %326 = sbr.rel (%p324) target = $region52
        $region51: #{tpu_custom_call.1} parent=11 // pred_region
          _
        $region52: #{tpu_custom_call.1} parent=11 // pred_fallthru
          _
      $region12: #{tpu_custom_call.1} parent=5 // pred_fallthru
        _
      %p327 = scmp.lt.s32.totalorder %s20, 2
      // Predicated region
      $region53: #{tpu_custom_call.1} parent=5 // pred_check
        %p328 = pneg %p327
      $region54: #{tpu_custom_call.1} parent=5 // pred_check_branch
        %330 = sbr.rel (%p328) target = $region56
      $region55: #{tpu_custom_call.1} parent=5 // pred_region
        // Predicated region
        $region57: #{tpu_custom_call.1} parent=55 // pred_check
          %p331 = pneg %p40
        $region58: #{tpu_custom_call.1} parent=55 // pred_check_branch
          %333 = sbr.rel (%p331) target = $region60
        $region59: #{tpu_custom_call.1} parent=55 // pred_region
          %p334 = scmp.lt.s32.totalorder %s20, 1
          %s335 = scalar_select %p334, %s20, 1
          %s336 = smul.addr %s335, 8
          %s337 = scalar_lea.vmem %s0, %s336
        $region60: #{tpu_custom_call.1} parent=55 // pred_fallthru
          _
      $region56: #{tpu_custom_call.1} parent=5 // pred_fallthru
        _
      %p338 = scmp.le.s32.totalorder 1, %s20
      %p339 = scmp.lt.s32.totalorder %s20, 3
      %p340 = pnand %p338, %p339
      %p341 = pneg %p340
      // Predicated region
      $region61: #{tpu_custom_call.1} parent=5 // pred_check
        _
      $region62: #{tpu_custom_call.1} parent=5 // pred_check_branch
        %343 = sbr.rel (%p340) target = $region64
      $region63: #{tpu_custom_call.1} parent=5 // pred_region
        %s344 = ssub.s32 %s20, 1
        %p345 = scmp.lt.s32.totalorder %s25, 1
        %s346 = scalar_select %p345, %s25, 1
        %s347 = smul.addr %s346, 8
        %s348 = scalar_lea.vmem %s0, %s347
        %p349 = pneg %p46
        %p350 = pneg %p43
        %p351 = pneg %p67
        %p352 = pneg %p64
        %p353 = pneg %p88
        %p354 = pneg %p85
        %p355 = pneg %p109
        %p356 = pneg %p106
        %p357 = pneg %p130
        %p358 = pneg %p127
        %p359 = pneg %p151
        %p360 = pneg %p148
        %p361 = pneg %p172
        %p362 = pneg %p169
        %p363 = pneg %p193
        %p364 = pneg %p190
        %p365 = pneg %p214
        %p366 = pneg %p211
        %p367 = pneg %p235
        %p368 = pneg %p232
        %p369 = pneg %p256
        %p370 = pneg %p253
        %p371 = pneg %p282
        %p372 = pneg %p279
        %s373 = sand.u32 %s269, 1
        %s374 = scalar_lea.sflag [#allocation3], %s373
        %s375 = sand.u32 %s269, 1
        %s376 = smul.addr %s375, 8
        %s377 = scalar_lea.vmem [#allocation2], %s376
        %p378 = scmp.lt.s32.totalorder %s25, 1
        %s379 = scalar_select %p378, %s25, 1
        %s380 = smul.addr %s379, 8
        %s381 = scalar_lea.vmem %s0, %s380
        %v382 = vld [vmem:[%s381] sm:$0xff]
        %v383 = vmul.f32 %v382, %v382
        %vm384 = vcmask 261120
        %v385 = vsel %vm384, %v383, 0.0
        %386 = vadd.xlane.f32.xlu0 %v385
        %v387 = vpop.xlane.xlu0 %386
        %v388 = vrcp.pop 32.0
        %v389 = vmul.f32 %v387, %v388
        %v390 = vadd.f32 %v389, 1e-05
        %v391 = vrsqrt.pop %v390
        %v392 = vmul.f32 %v382, %v391
        %v393 = vld [vmem:[%s1] sm:$0x1]
        %v395 = vlaneseq
        %v396 = vshrl.u32 %v395, 7
        %v397 = vsub.s32 0, %v396
        %v398 = vrot.slane %v393, %v397
        %v400 = vmul.f32 %v392, %v398
        %v401 = vld [vmem:[%s2] sm:$0xff]
        %v402 = vld [vmem:[%s2 + $0x8] sm:$0xff]
        %v403 = vld [vmem:[%s2 + $0x10] sm:$0xff]
        %v404 = vld [vmem:[%s2 + $0x18] sm:$0xff]
        %v406 = vsel %vm384, %v400, 0
        %408 = vmatprep.subr.mxu0 0.0
        %409 = vmatpush1.msra.mxu0 0.0
        %410 = vmatprep.subr.mxu0 0.0
        %411 = vmatpush1.msra.mxu0 0.0
        %412 = vmatprep.subr.mxu0 0.0
        %413 = vmatpush1.msra.mxu0 0.0
        %414 = vmatprep.subr.mxu0 0.0
        %415 = vmatpush1.msra.mxu0 0.0
        %416 = vmatprep.subr.mxu0 0.0
        %417 = vmatpush1.msra.mxu0 0.0
        %418 = vmatprep.subr.mxu0 0.0
        %419 = vmatpush1.msra.mxu0 0.0
        %420 = vmatprep.subr.mxu0 0.0
        %421 = vmatpush1.msra.mxu0 0.0
        %422 = vmatprep.subr.mxu0 0.0
        %423 = vmatpush1.msra.mxu0 0.0
        %424 = vmatprep.subr.mxu0 0.0
        %425 = vmatpush1.msra.mxu0 0.0
        %426 = vmatprep.subr.mxu0 0.0
        %427 = vmatpush1.msra.mxu0 0.0
        %428 = vmatprep.subr.mxu0 0.0
        %429 = vmatpush1.msra.mxu0 0.0
        %430 = vmatprep.subr.mxu0 0.0
        %431 = vmatpush1.msra.mxu0 0.0
        %432 = vmatprep.subr.mxu0 0.0
        %433 = vmatpush1.msra.mxu0 %v404
        %434 = vmatprep.subr.mxu0 0.0
        %435 = vmatpush1.msra.mxu0 %v403
        %436 = vmatprep.subr.mxu0 0.0
        %437 = vmatpush1.msra.mxu0 %v402
        %438 = vmatprep.subr.mxu0 0.0
        %439 = vmatpush1.msra.mxu0 %v401
        %440 = vmatprep.subr.mxu0 0.0
        %441 = vmatpush2.msra.mxu0 0.0
        %442 = vmatprep.subr.mxu0 0.0
        %443 = vmatpush2.msra.mxu0 0.0
        %444 = vmatprep.subr.mxu0 0.0
        %445 = vmatpush2.msra.mxu0 0.0
        %446 = vmatprep.subr.mxu0 0.0
        %447 = vmatpush2.msra.mxu0 0.0
        %448 = vmatprep.subr.mxu0 0.0
        %449 = vmatpush2.msra.mxu0 0.0
        %450 = vmatprep.subr.mxu0 0.0
        %451 = vmatpush2.msra.mxu0 0.0
        %452 = vmatprep.subr.mxu0 0.0
        %453 = vmatpush2.msra.mxu0 0.0
        %454 = vmatprep.subr.mxu0 0.0
        %455 = vmatpush2.msra.mxu0 0.0
        %456 = vmatprep.subr.mxu0 0.0
        %457 = vmatpush2.msra.mxu0 0.0
        %458 = vmatprep.subr.mxu0 0.0
        %459 = vmatpush2.msra.mxu0 0.0
        %460 = vmatprep.subr.mxu0 0.0
        %461 = vmatpush2.msra.mxu0 0.0
        %462 = vmatprep.subr.mxu0 0.0
        %463 = vmatpush2.msra.mxu0 0.0
        %464 = vmatprep.subr.mxu0 0.0
        %465 = vmatpush2.msra.mxu0 0.0
        %466 = vmatprep.subr.mxu0 0.0
        %467 = vmatpush2.msra.mxu0 0.0
        %468 = vmatprep.subr.mxu0 0.0
        %469 = vmatpush2.msra.mxu0 0.0
        %470 = vmatprep.subr.mxu0 0.0
        %471 = vmatpush2.msra.mxu0 0.0
        %472 = vmatprep.mubr.f32.mxu0 0.0
        %473 = vmatmul.mubr.f32.gmra.mxu0 %v406
        %v474 = vpop.f32.mrf.mxu0
        %v475 = vadd.f32 0.0, %v474
        %v476 = vpop.f32.mrf.mxu0
        %477 = vdwg.mxu0
        %v479 = vrot.slane %v475, 5
        %vm481 = vcmask 1042432
        %v482 = vsel %vm481, 0.0, %v479
        %v483 = vld [vmem:[%s3] sm:$0x1]
        %v484 = vlaneseq
        %v485 = vshrl.u32 %v484, 7
        %v486 = vsub.s32 0, %v485
        %v487 = vrot.slane %v483, %v486
        %v488 = vmul.f32 %v482, %v487
        %v489 = vadd.f32 %v488, 0.0
        %v490 = vld [vmem:[%s3 + $0x1] sm:$0x1]
        %v491 = vlaneseq
        %v492 = vshrl.u32 %v491, 7
        %v493 = vsub.s32 0, %v492
        %v494 = vrot.slane %v490, %v493
        %v495 = vmul.f32 %v482, %v494
        %v496 = vmul.f32 %v479, %v494
        %vm499 = vcmask 1046528
        %v500 = vrot.slane %v495, 1
        %v501 = vrot.slane %v496, 1
        %v502 = vsel %vm499, %v500, %v501
        %v504 = vadd.f32 %v489, %v502
        %v505 = vld [vmem:[%s3 + $0x2] sm:$0x1]
        %v506 = vlaneseq
        %v507 = vshrl.u32 %v506, 7
        %v508 = vsub.s32 0, %v507
        %v509 = vrot.slane %v505, %v508
        %v510 = vmul.f32 %v482, %v509
        %v511 = vmul.f32 %v479, %v509
        %vm514 = vcmask 1045504
        %v515 = vrot.slane %v510, 2
        %v516 = vrot.slane %v511, 2
        %v517 = vsel %vm514, %v515, %v516
        %v519 = vadd.f32 %v504, %v517
        %v520 = vld [vmem:[%s3 + $0x3] sm:$0x1]
        %v521 = vlaneseq
        %v522 = vshrl.u32 %v521, 7
        %v523 = vsub.s32 0, %v522
        %v524 = vrot.slane %v520, %v523
        %v525 = vmul.f32 %v482, %v524
        %v526 = vmul.f32 %v479, %v524
        %vm529 = vcmask 1044480
        %v530 = vrot.slane %v525, 3
        %v531 = vrot.slane %v526, 3
        %v532 = vsel %vm529, %v530, %v531
        %v534 = vadd.f32 %v519, %v532
        %v535 = vld [vmem:[%s4] sm:$0x1]
        %v537 = vlaneseq
        %v538 = vshrl.u32 %v537, 7
        %v539 = vsub.s32 0, %v538
        %v540 = vrot.slane %v535, %v539
        %v542 = vadd.f32 %v534, %v540
        %v543 = vsub.f32 0.0, %v542
        %v544 = vmul.f32 %v543, 1.442695
        %v545 = vpow.pop %v544
        %v546 = vadd.f32 %v545, 1.0
        %v547 = vrcp.pop %v546
        %v548 = vmul.f32 1.0, %v547
        %v549 = vmul.f32 %v542, %v548
        %v550 = vld [vmem:[%s5] sm:$0xff]
        %v551 = vld [vmem:[%s5 + $0x8] sm:$0xff]
        %v552 = vld [vmem:[%s5 + $0x10] sm:$0xff]
        %v553 = vld [vmem:[%s5 + $0x18] sm:$0xff]
        %v554 = vld [vmem:[%s5 + $0x20] sm:$0xff]
        %v555 = vld [vmem:[%s5 + $0x28] sm:$0xff]
        %v556 = vld [vmem:[%s5 + $0x30] sm:$0xff]
        %v557 = vld [vmem:[%s5 + $0x38] sm:$0xff]
        %vm558 = vcmask 523264
        %v560 = vsel %vm558, %v549, 0
        %562 = vmatprep.subr.mxu0 0.0
        %563 = vmatpush1.msra.mxu0 0.0
        %564 = vmatprep.subr.mxu0 0.0
        %565 = vmatpush1.msra.mxu0 0.0
        %566 = vmatprep.subr.mxu0 0.0
        %567 = vmatpush1.msra.mxu0 0.0
        %568 = vmatprep.subr.mxu0 0.0
        %569 = vmatpush1.msra.mxu0 0.0
        %570 = vmatprep.subr.mxu0 0.0
        %571 = vmatpush1.msra.mxu0 0.0
        %572 = vmatprep.subr.mxu0 0.0
        %573 = vmatpush1.msra.mxu0 0.0
        %574 = vmatprep.subr.mxu0 0.0
        %575 = vmatpush1.msra.mxu0 0.0
        %576 = vmatprep.subr.mxu0 0.0
        %577 = vmatpush1.msra.mxu0 0.0
        %578 = vmatprep.subr.mxu0 0.0
        %579 = vmatpush1.msra.mxu0 %v557
        %580 = vmatprep.subr.mxu0 0.0
        %581 = vmatpush1.msra.mxu0 %v556
        %582 = vmatprep.subr.mxu0 0.0
        %583 = vmatpush1.msra.mxu0 %v555
        %584 = vmatprep.subr.mxu0 0.0
        %585 = vmatpush1.msra.mxu0 %v554
        %586 = vmatprep.subr.mxu0 0.0
        %587 = vmatpush1.msra.mxu0 %v553
        %588 = vmatprep.subr.mxu0 0.0
        %589 = vmatpush1.msra.mxu0 %v552
        %590 = vmatprep.subr.mxu0 0.0
        %591 = vmatpush1.msra.mxu0 %v551
        %592 = vmatprep.subr.mxu0 0.0
        %593 = vmatpush1.msra.mxu0 %v550
        %594 = vmatprep.subr.mxu0 0.0
        %595 = vmatpush2.msra.mxu0 0.0
        %596 = vmatprep.subr.mxu0 0.0
        %597 = vmatpush2.msra.mxu0 0.0
        %598 = vmatprep.subr.mxu0 0.0
        %599 = vmatpush2.msra.mxu0 0.0
        %600 = vmatprep.subr.mxu0 0.0
        %601 = vmatpush2.msra.mxu0 0.0
        %602 = vmatprep.subr.mxu0 0.0
        %603 = vmatpush2.msra.mxu0 0.0
        %604 = vmatprep.subr.mxu0 0.0
        %605 = vmatpush2.msra.mxu0 0.0
        %606 = vmatprep.subr.mxu0 0.0
        %607 = vmatpush2.msra.mxu0 0.0
        %608 = vmatprep.subr.mxu0 0.0
        %609 = vmatpush2.msra.mxu0 0.0
        %610 = vmatprep.subr.mxu0 0.0
        %611 = vmatpush2.msra.mxu0 0.0
        %612 = vmatprep.subr.mxu0 0.0
        %613 = vmatpush2.msra.mxu0 0.0
        %614 = vmatprep.subr.mxu0 0.0
        %615 = vmatpush2.msra.mxu0 0.0
        %616 = vmatprep.subr.mxu0 0.0
        %617 = vmatpush2.msra.mxu0 0.0
        %618 = vmatprep.subr.mxu0 0.0
        %619 = vmatpush2.msra.mxu0 0.0
        %620 = vmatprep.subr.mxu0 0.0
        %621 = vmatpush2.msra.mxu0 0.0
        %622 = vmatprep.subr.mxu0 0.0
        %623 = vmatpush2.msra.mxu0 0.0
        %624 = vmatprep.subr.mxu0 0.0
        %625 = vmatpush2.msra.mxu0 0.0
        %626 = vmatprep.mubr.f32.mxu0 0.0
        %627 = vmatmul.mubr.f32.gmra.mxu0 %v560
        %v628 = vpop.f32.mrf.mxu0
        %v629 = vadd.f32 0.0, %v628
        %v630 = vpop.f32.mrf.mxu0
        %631 = vdwg.mxu0
        %v632 = vld [vmem:[%s6] sm:$0x1]
        %634 = vset.pattern.permute.xlu0 0
        %635 = vperm.xlu0 %634, %v629
        %v636 = vpop.permute.xlu0 %635
        %v638 = vlaneseq
        %v639 = vshrl.u32 %v638, 7
        %v640 = vsub.s32 0, %v639
        %v641 = vrot.slane %v632, %v640
        %v642 = vmul.f32 %v636, %v641
        %v643 = vadd.f32 %v642, 0.0
        %v644 = vld [vmem:[%s6 + $0x1] sm:$0x1]
        %645 = vset.pattern.permute.xlu0 1
        %646 = vperm.xlu0 %645, %v629
        %v647 = vpop.permute.xlu0 %646
        %v649 = vlaneseq
        %v650 = vshrl.u32 %v649, 7
        %v651 = vsub.s32 0, %v650
        %v652 = vrot.slane %v644, %v651
        %v653 = vmul.f32 %v647, %v652
        %v654 = vadd.f32 %v643, %v653
        %v655 = vld [vmem:[%s7] sm:$0x1]
        %v657 = vlaneseq
        %v658 = vshrl.u32 %v657, 7
        %v659 = vsub.s32 0, %v658
        %v660 = vrot.slane %v655, %v659
        %v662 = vadd.f32 %v654, %v660
        %vm663 = vcmp.gt.f32.partialorder %v662, 20.0
        %v664 = vmin.f32 %v662, 20.0
        %v665 = vmul.f32 %v664, 1.442695
        %v666 = vpow.pop %v665
        %v667 = vadd.f32 %v666, 1.0
        %v668 = vlog2.pop %v667
        %v669 = vmul.f32 %v668, 0.6931472
        %v670 = vmul.f32 -0.5, %v666
        %v671 = vadd.f32 %v670, 1.0
        %v672 = vmul.f32 %v671, %v666
        %v673 = vand.u32 2147483647, %v666
        %vm674 = vcmp.lt.f32.partialorder %v673, 0.0004427343
        %v675 = vsel %vm674, %v672, %v669
        %v676 = vsel %vm663, %v662, %v675
        %v677 = vld [vmem:[%s8] sm:$0xff]
        %v678 = vld [vmem:[%s8 + $0x8] sm:$0xff]
        %v679 = vmul.f32 %v676, %v549
        %v680 = vlaneseq
        %v681 = vshrl.u32 %v680, 7
        %v682 = vsub.s32 0, %v681
        %v683 = vrot.slane %v629, %v682
        %s685 = sor.u32 256, 2
        %686 = vbcast.lane.b32.xlu0 %v683, %s685
        %v687 = vpop.permute.xlu0 %686
        %s689 = sor.u32 256, 10
        %690 = vbcast.lane.b32.xlu0 %v683, %s689
        %v691 = vpop.permute.xlu0 %690
        %v692 = vlaneseq
        %v693 = vshrl.u32 %v692, 7
        %v694 = vsub.s32 1, %v693
        %v695 = vrot.slane %v629, %v694
        %s697 = sor.u32 256, 2
        %698 = vbcast.lane.b32.xlu0 %v695, %s697
        %v699 = vpop.permute.xlu0 %698
        %s701 = sor.u32 256, 10
        %702 = vbcast.lane.b32.xlu0 %v695, %s701
        %v703 = vpop.permute.xlu0 %702
        %v704 = vlaneseq
        %v705 = vshrl.u32 %v704, 7
        %v706 = vsub.s32 2, %v705
        %v707 = vrot.slane %v629, %v706
        %s709 = sor.u32 256, 2
        %710 = vbcast.lane.b32.xlu0 %v707, %s709
        %v711 = vpop.permute.xlu0 %710
        %s713 = sor.u32 256, 10
        %714 = vbcast.lane.b32.xlu0 %v707, %s713
        %v715 = vpop.permute.xlu0 %714
        %v716 = vlaneseq
        %v717 = vshrl.u32 %v716, 7
        %v718 = vsub.s32 3, %v717
        %v719 = vrot.slane %v629, %v718
        %s721 = sor.u32 256, 2
        %722 = vbcast.lane.b32.xlu0 %v719, %s721
        %v723 = vpop.permute.xlu0 %722
        %s725 = sor.u32 256, 10
        %726 = vbcast.lane.b32.xlu0 %v719, %s725
        %v727 = vpop.permute.xlu0 %726
        %v728 = vlaneseq
        %v729 = vshrl.u32 %v728, 7
        %v730 = vsub.s32 4, %v729
        %v731 = vrot.slane %v629, %v730
        %s733 = sor.u32 256, 2
        %734 = vbcast.lane.b32.xlu0 %v731, %s733
        %v735 = vpop.permute.xlu0 %734
        %s737 = sor.u32 256, 10
        %738 = vbcast.lane.b32.xlu0 %v731, %s737
        %v739 = vpop.permute.xlu0 %738
        %v740 = vlaneseq
        %v741 = vshrl.u32 %v740, 7
        %v742 = vsub.s32 5, %v741
        %v743 = vrot.slane %v629, %v742
        %s745 = sor.u32 256, 2
        %746 = vbcast.lane.b32.xlu0 %v743, %s745
        %v747 = vpop.permute.xlu0 %746
        %s749 = sor.u32 256, 10
        %750 = vbcast.lane.b32.xlu0 %v743, %s749
        %v751 = vpop.permute.xlu0 %750
        %v752 = vlaneseq
        %v753 = vshrl.u32 %v752, 7
        %v754 = vsub.s32 6, %v753
        %v755 = vrot.slane %v629, %v754
        %s757 = sor.u32 256, 2
        %758 = vbcast.lane.b32.xlu0 %v755, %s757
        %v759 = vpop.permute.xlu0 %758
        %s761 = sor.u32 256, 10
        %762 = vbcast.lane.b32.xlu0 %v755, %s761
        %v763 = vpop.permute.xlu0 %762
        %v764 = vlaneseq
        %v765 = vshrl.u32 %v764, 7
        %v766 = vsub.s32 7, %v765
        %v767 = vrot.slane %v629, %v766
        %s769 = sor.u32 256, 2
        %770 = vbcast.lane.b32.xlu0 %v767, %s769
        %v771 = vpop.permute.xlu0 %770
        %s773 = sor.u32 256, 10
        %774 = vbcast.lane.b32.xlu0 %v767, %s773
        %v775 = vpop.permute.xlu0 %774
        %s777 = sor.u32 256, 18
        %778 = vbcast.lane.b32.xlu0 %v683, %s777
        %v779 = vpop.permute.xlu0 %778
        %s781 = sor.u32 256, 26
        %782 = vbcast.lane.b32.xlu0 %v683, %s781
        %v783 = vpop.permute.xlu0 %782
        %s785 = sor.u32 256, 18
        %786 = vbcast.lane.b32.xlu0 %v695, %s785
        %v787 = vpop.permute.xlu0 %786
        %s789 = sor.u32 256, 26
        %790 = vbcast.lane.b32.xlu0 %v695, %s789
        %v791 = vpop.permute.xlu0 %790
        %s793 = sor.u32 256, 18
        %794 = vbcast.lane.b32.xlu0 %v707, %s793
        %v795 = vpop.permute.xlu0 %794
        %s797 = sor.u32 256, 26
        %798 = vbcast.lane.b32.xlu0 %v707, %s797
        %v799 = vpop.permute.xlu0 %798
        %s801 = sor.u32 256, 18
        %802 = vbcast.lane.b32.xlu0 %v719, %s801
        %v803 = vpop.permute.xlu0 %802
        %s805 = sor.u32 256, 26
        %806 = vbcast.lane.b32.xlu0 %v719, %s805
        %v807 = vpop.permute.xlu0 %806
        %s809 = sor.u32 256, 18
        %810 = vbcast.lane.b32.xlu0 %v731, %s809
        %v811 = vpop.permute.xlu0 %810
        %s813 = sor.u32 256, 26
        %814 = vbcast.lane.b32.xlu0 %v731, %s813
        %v815 = vpop.permute.xlu0 %814
        %s817 = sor.u32 256, 18
        %818 = vbcast.lane.b32.xlu0 %v743, %s817
        %v819 = vpop.permute.xlu0 %818
        %s821 = sor.u32 256, 26
        %822 = vbcast.lane.b32.xlu0 %v743, %s821
        %v823 = vpop.permute.xlu0 %822
        %s825 = sor.u32 256, 18
        %826 = vbcast.lane.b32.xlu0 %v755, %s825
        %v827 = vpop.permute.xlu0 %826
        %s829 = sor.u32 256, 26
        %830 = vbcast.lane.b32.xlu0 %v755, %s829
        %v831 = vpop.permute.xlu0 %830
        %s833 = sor.u32 256, 18
        %834 = vbcast.lane.b32.xlu0 %v767, %s833
        %v835 = vpop.permute.xlu0 %834
        %s837 = sor.u32 256, 26
        %838 = vbcast.lane.b32.xlu0 %v767, %s837
        %v839 = vpop.permute.xlu0 %838
        %v840 = vlaneseq
        %v841 = vshrl.u32 %v840, 7
        %v842 = vsub.s32 0, %v841
        %v843 = vrot.slane %v676, %v842
        %v844 = vmul.f32 %v843, %v677
        %v845 = vmul.f32 %v843, %v678
        %v846 = vmul.f32 %v844, 1.442695
        %v847 = vpow.pop %v846
        %v848 = vmul.f32 %v845, 1.442695
        %v849 = vpow.pop %v848
        %v850 = vlaneseq
        %v851 = vshrl.u32 %v850, 7
        %v852 = vsub.s32 0, %v851
        %v853 = vrot.slane %v679, %v852
        %v854 = vmul.f32 %v853, %v687
        %v855 = vmul.f32 %v853, %v691
        %v856 = vmul.f32 %v847, 0.0
        %v857 = vmul.f32 %v849, 0.0
        %v858 = vadd.f32 %v856, %v854
        %v859 = vadd.f32 %v857, %v855
        %v860 = vmul.f32 %v858, %v779
        %v861 = vmul.f32 %v859, %v783
        %v862 = vsel %vm558, %v860, 0.0
        %v863 = vsel %vm558, %v861, 0.0
        %v864 = vadd.f32 %v862, %v863
        %v865 = vrot.slane %v864, 4
        %v866 = vadd.f32 %v864, %v865
        %v867 = vrot.slane %v866, 2
        %v868 = vadd.f32 %v866, %v867
        %v869 = vrot.slane %v868, 1
        %v870 = vadd.f32 %v868, %v869
        %v871 = vlaneseq
        %v872 = vshrl.u32 %v871, 7
        %v873 = vsub.s32 1, %v872
        %v874 = vrot.slane %v676, %v873
        %v875 = vmul.f32 %v874, %v677
        %v876 = vmul.f32 %v874, %v678
        %v877 = vmul.f32 %v875, 1.442695
        %v878 = vpow.pop %v877
        %v879 = vmul.f32 %v876, 1.442695
        %v880 = vpow.pop %v879
        %v881 = vlaneseq
        %v882 = vshrl.u32 %v881, 7
        %v883 = vsub.s32 1, %v882
        %v884 = vrot.slane %v679, %v883
        %v885 = vmul.f32 %v884, %v699
        %v886 = vmul.f32 %v884, %v703
        %v887 = vmul.f32 %v878, %v858
        %v888 = vmul.f32 %v880, %v859
        %v889 = vadd.f32 %v887, %v885
        %v890 = vadd.f32 %v888, %v886
        %v891 = vmul.f32 %v889, %v787
        %v892 = vmul.f32 %v890, %v791
        %v893 = vsel %vm558, %v891, 0.0
        %v894 = vsel %vm558, %v892, 0.0
        %v895 = vadd.f32 %v893, %v894
        %v896 = vrot.slane %v895, 4
        %v897 = vadd.f32 %v895, %v896
        %v898 = vrot.slane %v897, 2
        %v899 = vadd.f32 %v897, %v898
        %v900 = vrot.slane %v899, 1
        %v901 = vadd.f32 %v899, %v900
        %v902 = vlaneseq
        %v903 = vshrl.u32 %v902, 7
        %v904 = vsub.s32 2, %v903
        %v905 = vrot.slane %v676, %v904
        %v906 = vmul.f32 %v905, %v677
        %v907 = vmul.f32 %v905, %v678
        %v908 = vmul.f32 %v906, 1.442695
        %v909 = vpow.pop %v908
        %v910 = vmul.f32 %v907, 1.442695
        %v911 = vpow.pop %v910
        %v912 = vlaneseq
        %v913 = vshrl.u32 %v912, 7
        %v914 = vsub.s32 2, %v913
        %v915 = vrot.slane %v679, %v914
        %v916 = vmul.f32 %v915, %v711
        %v917 = vmul.f32 %v915, %v715
        %v918 = vmul.f32 %v909, %v889
        %v919 = vmul.f32 %v911, %v890
        %v920 = vadd.f32 %v918, %v916
        %v921 = vadd.f32 %v919, %v917
        %v922 = vmul.f32 %v920, %v795
        %v923 = vmul.f32 %v921, %v799
        %v924 = vsel %vm558, %v922, 0.0
        %v925 = vsel %vm558, %v923, 0.0
        %v926 = vadd.f32 %v924, %v925
        %v927 = vrot.slane %v926, 4
        %v928 = vadd.f32 %v926, %v927
        %v929 = vrot.slane %v928, 2
        %v930 = vadd.f32 %v928, %v929
        %v931 = vrot.slane %v930, 1
        %v932 = vadd.f32 %v930, %v931
        %v933 = vlaneseq
        %v934 = vshrl.u32 %v933, 7
        %v935 = vsub.s32 3, %v934
        %v936 = vrot.slane %v676, %v935
        %v937 = vmul.f32 %v936, %v677
        %v938 = vmul.f32 %v936, %v678
        %v939 = vmul.f32 %v937, 1.442695
        %v940 = vpow.pop %v939
        %v941 = vmul.f32 %v938, 1.442695
        %v942 = vpow.pop %v941
        %v943 = vlaneseq
        %v944 = vshrl.u32 %v943, 7
        %v945 = vsub.s32 3, %v944
        %v946 = vrot.slane %v679, %v945
        %v947 = vmul.f32 %v946, %v723
        %v948 = vmul.f32 %v946, %v727
        %v949 = vmul.f32 %v940, %v920
        %v950 = vmul.f32 %v942, %v921
        %v951 = vadd.f32 %v949, %v947
        %v952 = vadd.f32 %v950, %v948
        %v953 = vmul.f32 %v951, %v803
        %v954 = vmul.f32 %v952, %v807
        %v955 = vsel %vm558, %v953, 0.0
        %v956 = vsel %vm558, %v954, 0.0
        %v957 = vadd.f32 %v955, %v956
        %v958 = vrot.slane %v957, 4
        %v959 = vadd.f32 %v957, %v958
        %v960 = vrot.slane %v959, 2
        %v961 = vadd.f32 %v959, %v960
        %v962 = vrot.slane %v961, 1
        %v963 = vadd.f32 %v961, %v962
        %v964 = vlaneseq
        %v965 = vshrl.u32 %v964, 7
        %v966 = vsub.s32 4, %v965
        %v967 = vrot.slane %v676, %v966
        %v968 = vmul.f32 %v967, %v677
        %v969 = vmul.f32 %v967, %v678
        %v970 = vmul.f32 %v968, 1.442695
        %v971 = vpow.pop %v970
        %v972 = vmul.f32 %v969, 1.442695
        %v973 = vpow.pop %v972
        %v974 = vlaneseq
        %v975 = vshrl.u32 %v974, 7
        %v976 = vsub.s32 4, %v975
        %v977 = vrot.slane %v679, %v976
        %v978 = vmul.f32 %v977, %v735
        %v979 = vmul.f32 %v977, %v739
        %v980 = vmul.f32 %v971, %v951
        %v981 = vmul.f32 %v973, %v952
        %v982 = vadd.f32 %v980, %v978
        %v983 = vadd.f32 %v981, %v979
        %v984 = vmul.f32 %v982, %v811
        %v985 = vmul.f32 %v983, %v815
        %v986 = vsel %vm558, %v984, 0.0
        %v987 = vsel %vm558, %v985, 0.0
        %v988 = vadd.f32 %v986, %v987
        %v989 = vrot.slane %v988, 4
        %v990 = vadd.f32 %v988, %v989
        %v991 = vrot.slane %v990, 2
        %v992 = vadd.f32 %v990, %v991
        %v993 = vrot.slane %v992, 1
        %v994 = vadd.f32 %v992, %v993
        %v995 = vlaneseq
        %v996 = vshrl.u32 %v995, 7
        %v997 = vsub.s32 5, %v996
        %v998 = vrot.slane %v676, %v997
        %v999 = vmul.f32 %v998, %v677
        %v1000 = vmul.f32 %v998, %v678
        %v1001 = vmul.f32 %v999, 1.442695
        %v1002 = vpow.pop %v1001
        %v1003 = vmul.f32 %v1000, 1.442695
        %v1004 = vpow.pop %v1003
        %v1005 = vlaneseq
        %v1006 = vshrl.u32 %v1005, 7
        %v1007 = vsub.s32 5, %v1006
        %v1008 = vrot.slane %v679, %v1007
        %v1009 = vmul.f32 %v1008, %v747
        %v1010 = vmul.f32 %v1008, %v751
        %v1011 = vmul.f32 %v1002, %v982
        %v1012 = vmul.f32 %v1004, %v983
        %v1013 = vadd.f32 %v1011, %v1009
        %v1014 = vadd.f32 %v1012, %v1010
        %v1015 = vmul.f32 %v1013, %v819
        %v1016 = vmul.f32 %v1014, %v823
        %v1017 = vsel %vm558, %v1015, 0.0
        %v1018 = vsel %vm558, %v1016, 0.0
        %v1019 = vadd.f32 %v1017, %v1018
        %v1020 = vrot.slane %v1019, 4
        %v1021 = vadd.f32 %v1019, %v1020
        %v1022 = vrot.slane %v1021, 2
        %v1023 = vadd.f32 %v1021, %v1022
        %v1024 = vrot.slane %v1023, 1
        %v1025 = vadd.f32 %v1023, %v1024
        %v1026 = vlaneseq
        %v1027 = vshrl.u32 %v1026, 7
        %v1028 = vsub.s32 6, %v1027
        %v1029 = vrot.slane %v676, %v1028
        %v1030 = vmul.f32 %v1029, %v677
        %v1031 = vmul.f32 %v1029, %v678
        %v1032 = vmul.f32 %v1030, 1.442695
        %v1033 = vpow.pop %v1032
        %v1034 = vmul.f32 %v1031, 1.442695
        %v1035 = vpow.pop %v1034
        %v1036 = vlaneseq
        %v1037 = vshrl.u32 %v1036, 7
        %v1038 = vsub.s32 6, %v1037
        %v1039 = vrot.slane %v679, %v1038
        %v1040 = vmul.f32 %v1039, %v759
        %v1041 = vmul.f32 %v1039, %v763
        %v1042 = vmul.f32 %v1033, %v1013
        %v1043 = vmul.f32 %v1035, %v1014
        %v1044 = vadd.f32 %v1042, %v1040
        %v1045 = vadd.f32 %v1043, %v1041
        %v1046 = vmul.f32 %v1044, %v827
        %v1047 = vmul.f32 %v1045, %v831
        %v1048 = vsel %vm558, %v1046, 0.0
        %v1049 = vsel %vm558, %v1047, 0.0
        %v1050 = vadd.f32 %v1048, %v1049
        %v1051 = vrot.slane %v1050, 4
        %v1052 = vadd.f32 %v1050, %v1051
        %v1053 = vrot.slane %v1052, 2
        %v1054 = vadd.f32 %v1052, %v1053
        %v1055 = vrot.slane %v1054, 1
        %v1056 = vadd.f32 %v1054, %v1055
        %v1057 = vlaneseq
        %v1058 = vshrl.u32 %v1057, 7
        %v1059 = vsub.s32 7, %v1058
        %v1060 = vrot.slane %v676, %v1059
        %v1061 = vmul.f32 %v1060, %v677
        %v1062 = vmul.f32 %v1060, %v678
        %v1063 = vmul.f32 %v1061, 1.442695
        %v1064 = vpow.pop %v1063
        %v1065 = vmul.f32 %v1062, 1.442695
        %v1066 = vpow.pop %v1065
        %v1067 = vlaneseq
        %v1068 = vshrl.u32 %v1067, 7
        %v1069 = vsub.s32 7, %v1068
        %v1070 = vrot.slane %v679, %v1069
        %v1071 = vmul.f32 %v1070, %v771
        %v1072 = vmul.f32 %v1070, %v775
        %v1073 = vmul.f32 %v1064, %v1044
        %v1074 = vmul.f32 %v1066, %v1045
        %v1075 = vadd.f32 %v1073, %v1071
        %v1076 = vadd.f32 %v1074, %v1072
        %v1077 = vmul.f32 %v1075, %v835
        %v1078 = vmul.f32 %v1076, %v839
        %v1079 = vsel %vm558, %v1077, 0.0
        %v1080 = vsel %vm558, %v1078, 0.0
        %v1081 = vadd.f32 %v1079, %v1080
        %v1082 = vrot.slane %v1081, 4
        %v1083 = vadd.f32 %v1081, %v1082
        %v1084 = vrot.slane %v1083, 2
        %v1085 = vadd.f32 %v1083, %v1084
        %v1086 = vrot.slane %v1085, 1
        %v1087 = vadd.f32 %v1085, %v1086
        %vm1088 = vcmask 1040384
        %v1089 = vsel %vm1088, %v870, %v901
        %vm1090 = vcmask 1041408
        %v1091 = vsel %vm1090, %v1089, %v932
        %v1092 = vsel %vm481, %v1091, %v963
        %vm1093 = vcmask 1043456
        %v1094 = vsel %vm1093, %v1092, %v994
        %v1095 = vsel %vm529, %v1094, %v1025
        %v1096 = vsel %vm514, %v1095, %v1056
        %v1097 = vsel %vm499, %v1096, %v1087
        %v1098 = vld [vmem:[%s9] sm:$0x1]
        %v1100 = vlaneseq
        %v1101 = vshrl.u32 %v1100, 7
        %v1102 = vsub.s32 0, %v1101
        %v1103 = vrot.slane %v1098, %v1102
        %v1105 = vmul.f32 %v549, %v1103
        %v1106 = vadd.f32 %v1097, %v1105
        %v1107 = vsub.f32 0.0, %v475
        %v1108 = vmul.f32 %v1107, 1.442695
        %v1109 = vpow.pop %v1108
        %v1110 = vadd.f32 %v1109, 1.0
        %v1111 = vrcp.pop %v1110
        %v1112 = vmul.f32 1.0, %v1111
        %v1113 = vmul.f32 %v475, %v1112
        %1115 = vrot.lane.b32.xlu0 %v1113, 64
        %v1116 = vpop.permute.xlu0 %1115
        %v1118 = vmul.f32 %v1106, %v1116
        %v1119 = vld [vmem:[%s10] sm:$0xff]
        %v1120 = vld [vmem:[%s10 + $0x8] sm:$0xff]
        %v1121 = vld [vmem:[%s10 + $0x10] sm:$0xff]
        %v1122 = vld [vmem:[%s10 + $0x18] sm:$0xff]
        %v1123 = vld [vmem:[%s10 + $0x20] sm:$0xff]
        %v1124 = vld [vmem:[%s10 + $0x28] sm:$0xff]
        %v1125 = vld [vmem:[%s10 + $0x30] sm:$0xff]
        %v1126 = vld [vmem:[%s10 + $0x38] sm:$0xff]
        %v1128 = vsel %vm558, %v1118, 0
        %1130 = vmatprep.subr.mxu0 0.0
        %1131 = vmatpush1.msra.mxu0 0.0
        %1132 = vmatprep.subr.mxu0 0.0
        %1133 = vmatpush1.msra.mxu0 0.0
        %1134 = vmatprep.subr.mxu0 0.0
        %1135 = vmatpush1.msra.mxu0 0.0
        %1136 = vmatprep.subr.mxu0 0.0
        %1137 = vmatpush1.msra.mxu0 0.0
        %1138 = vmatprep.subr.mxu0 0.0
        %1139 = vmatpush1.msra.mxu0 0.0
        %1140 = vmatprep.subr.mxu0 0.0
        %1141 = vmatpush1.msra.mxu0 0.0
        %1142 = vmatprep.subr.mxu0 0.0
        %1143 = vmatpush1.msra.mxu0 0.0
        %1144 = vmatprep.subr.mxu0 0.0
        %1145 = vmatpush1.msra.mxu0 0.0
        %1146 = vmatprep.subr.mxu0 0.0
        %1147 = vmatpush1.msra.mxu0 %v1126
        %1148 = vmatprep.subr.mxu0 0.0
        %1149 = vmatpush1.msra.mxu0 %v1125
        %1150 = vmatprep.subr.mxu0 0.0
        %1151 = vmatpush1.msra.mxu0 %v1124
        %1152 = vmatprep.subr.mxu0 0.0
        %1153 = vmatpush1.msra.mxu0 %v1123
        %1154 = vmatprep.subr.mxu0 0.0
        %1155 = vmatpush1.msra.mxu0 %v1122
        %1156 = vmatprep.subr.mxu0 0.0
        %1157 = vmatpush1.msra.mxu0 %v1121
        %1158 = vmatprep.subr.mxu0 0.0
        %1159 = vmatpush1.msra.mxu0 %v1120
        %1160 = vmatprep.subr.mxu0 0.0
        %1161 = vmatpush1.msra.mxu0 %v1119
        %1162 = vmatprep.subr.mxu0 0.0
        %1163 = vmatpush2.msra.mxu0 0.0
        %1164 = vmatprep.subr.mxu0 0.0
        %1165 = vmatpush2.msra.mxu0 0.0
        %1166 = vmatprep.subr.mxu0 0.0
        %1167 = vmatpush2.msra.mxu0 0.0
        %1168 = vmatprep.subr.mxu0 0.0
        %1169 = vmatpush2.msra.mxu0 0.0
        %1170 = vmatprep.subr.mxu0 0.0
        %1171 = vmatpush2.msra.mxu0 0.0
        %1172 = vmatprep.subr.mxu0 0.0
        %1173 = vmatpush2.msra.mxu0 0.0
        %1174 = vmatprep.subr.mxu0 0.0
        %1175 = vmatpush2.msra.mxu0 0.0
        %1176 = vmatprep.subr.mxu0 0.0
        %1177 = vmatpush2.msra.mxu0 0.0
        %1178 = vmatprep.subr.mxu0 0.0
        %1179 = vmatpush2.msra.mxu0 0.0
        %1180 = vmatprep.subr.mxu0 0.0
        %1181 = vmatpush2.msra.mxu0 0.0
        %1182 = vmatprep.subr.mxu0 0.0
        %1183 = vmatpush2.msra.mxu0 0.0
        %1184 = vmatprep.subr.mxu0 0.0
        %1185 = vmatpush2.msra.mxu0 0.0
        %1186 = vmatprep.subr.mxu0 0.0
        %1187 = vmatpush2.msra.mxu0 0.0
        %1188 = vmatprep.subr.mxu0 0.0
        %1189 = vmatpush2.msra.mxu0 0.0
        %1190 = vmatprep.subr.mxu0 0.0
        %1191 = vmatpush2.msra.mxu0 0.0
        %1192 = vmatprep.subr.mxu0 0.0
        %1193 = vmatpush2.msra.mxu0 0.0
        %1194 = vmatprep.mubr.f32.mxu0 0.0
        %1195 = vmatmul.mubr.f32.gmra.mxu0 %v1128
        %v1196 = vpop.f32.mrf.mxu0
        %v1197 = vadd.f32 %v382, %v1196
        %v1198 = vpop.f32.mrf.mxu0
        %1199 = vdwg.mxu0
        %1200 = vst.msk [vmem:[%s377] sm:$0xff] %vm384, %v1197
        %s1201 = sand.u32 %s269, 1
        %s1202 = scalar_lea.sflag [#allocation3], %s1201
        %s1203 = sand.u32 %s269, 1
        %s1204 = smul.addr %s1203, 8
        %s1205 = scalar_lea.vmem [#allocation2], %s1204
        // Predicated region
        $region65: #{tpu_custom_call.1} parent=63 // pred_check
          %p1206 = pneg %p279
        $region66: #{tpu_custom_call.1} parent=63 // pred_check_branch
          %1208 = sbr.rel (%p1206) target = $region68
        $region67: #{tpu_custom_call.1} parent=63 // pred_region
          %s1210 = ssub.s32 128, 128
          %1211 = vsyncadd %s1202, %s1210
          %s1212 = smul.addr %s25, 128
          %s1213 = scalar_lea.hbm %s11, %s1212
          %s1215 = sshll.u32 %s1205, 4
          %s1216 = int_to_ptr.vmem [resolvable:$true] %s1215
          %1218 = dma.vmem_to_hbm [thread:$0]  %s1216, 128, %s1213, %s1202
        $region68: #{tpu_custom_call.1} parent=63 // pred_fallthru
          _
      $region64: #{tpu_custom_call.1} parent=5 // pred_fallthru
        _
      %p1219 = scmp.le.s32.totalorder 2, %s20
      // Predicated region
      $region69: #{tpu_custom_call.1} parent=5 // pred_check
        %p1220 = pneg %p1219
      $region70: #{tpu_custom_call.1} parent=5 // pred_check_branch
        %1222 = sbr.rel (%p1220) target = $region72
      $region71: #{tpu_custom_call.1} parent=5 // pred_region
        %s1223 = ssub.s32 %s20, 2
        // Predicated region
        $region73: #{tpu_custom_call.1} parent=71 // pred_check
          %p1224 = pneg %p285
        $region74: #{tpu_custom_call.1} parent=71 // pred_check_branch
          %1226 = sbr.rel (%p1224) target = $region76
        $region75: #{tpu_custom_call.1} parent=71 // pred_region
          %s1227 = sand.u32 %s270, 1
          %s1228 = scalar_lea.sflag [#allocation3], %s1227
          %s1229 = sand.u32 %s270, 1
          %s1230 = smul.addr %s1229, 8
          %s1231 = scalar_lea.vmem [#allocation2], %s1230
          %1232 = dma.done %s1228, 128
        $region76: #{tpu_custom_call.1} parent=71 // pred_fallthru
          _
      $region72: #{tpu_custom_call.1} parent=5 // pred_fallthru
        _
    $region6: #{tpu_custom_call.1} parent=1 // loop_footer
      %s24 = sadd.s32 1, %s20
    $region7: #{tpu_custom_call.1} parent=1 // loop_footer_branch
      %19 = sbr.rel target = $region3
    $region8: #{tpu_custom_call.1} parent=1 // loop_exit
      _
    %1233 = vsyncpa [#allocation3], 1
    %s1234 = scalar_lea.sflag [#allocation3], 1
    %1235 = vsyncpa %s1234, 1

</llo_original>
